<compile_context>
chip_gen: v5e
topology: v5e:2x2
jax: 0.10.0
libtpu: 0.0.40
codegen_flags: <defaults>
</compile_context>

<pallas_src>
import jax
import jax.numpy as jnp
from jax import lax
from jax.experimental import pallas as pl
from jax.experimental.pallas import tpu as pltpu


def _round_up(n, m):
    return ((n + m - 1) // m) * m


def _convlstm_gate_kernel(p_ref, c_ref, w_ref, b_ref, h_out_ref, c_out_ref):
    """One M-tile of the fused ConvLSTM cell.

    p_ref : (bm, K)       im2col patches of [x ; h_pre]          (bf16)
    c_ref : (bm, Chid)    previous cell state                    (f32)
    w_ref : (K, 4*Chid)   packed conv weights, gate order [i,f,o,c] (bf16)
    b_ref : (1, 4*Chid)   packed bias (bx + bh), gate order [i,f,o,c] (f32)
    """
    chid = c_ref.shape[-1]

    # Single fused MXU matmul covers both convolutions and all k*k taps.
    g = jnp.dot(p_ref[...], w_ref[...], preferred_element_type=jnp.float32)
    g = g + b_ref[...]                                   # (bm, 4*Chid), f32

    # Gate order [ i | f | o | c ]: one wide sigmoid, one tanh.
    sig = jax.nn.sigmoid(g[:, :3 * chid])                # (bm, 3*Chid)
    c_cand = jnp.tanh(g[:, 3 * chid:])                   # (bm, Chid)

    i_g = sig[:, 0 * chid:1 * chid]
    f_g = sig[:, 1 * chid:2 * chid]
    o_g = sig[:, 2 * chid:3 * chid]

    c_new = f_g * c_ref[...] + i_g * c_cand
    c_out_ref[...] = c_new
    h_out_ref[...] = o_g * jnp.tanh(c_new)


def conv_lstm_cell(x_nchw, h_nchw, c_nchw, params, *, block_m=256):
    """ConvLSTM cell forward. Inputs/outputs are NCHW (PyTorch convention)."""
    wx, bx, wh, bh = params["wx"], params["bx"], params["wh"], params["bh"]
    kh1, kw1 = wx.shape[0], wx.shape[1]
    kh2, kw2 = wh.shape[0], wh.shape[1]
    assert (kh1 % 2 == 1 and kw1 % 2 == 1 and kh2 % 2 == 1 and kw2 % 2 == 1), \
        "fused 'same' convolution implemented for odd kernel sizes only"

    kh, kw = max(kh1, kh2), max(kw1, kw2)
    B, Cin, H, W = x_nchw.shape
    Chid = c_nchw.shape[1]
    Ctot = Cin + Chid

    x = jnp.transpose(x_nchw, (0, 2, 3, 1)).astype(jnp.float32)   # NHWC
    h = jnp.transpose(h_nchw, (0, 2, 3, 1)).astype(jnp.float32)
    c = jnp.transpose(c_nchw, (0, 2, 3, 1)).astype(jnp.float32)

    # ---- Fuse the two convs: concat inputs on channels, pad spatially ----
    xh = jnp.concatenate([x, h], axis=-1)                         # (B,H,W,Ctot)
    ph, pw = (kh - 1) // 2, (kw - 1) // 2
    xh_p = jnp.pad(xh, ((0, 0), (ph, ph), (pw, pw), (0, 0)))

    # ---- im2col once in the wrapper -> one contiguous (M, K) slab --------
    cols = []
    for dy in range(kh):
        for dx in range(kw):
            cols.append(xh_p[:, dy:dy + H, dx:dx + W, :])
    M = B * H * W
    K = kh * kw * Ctot
    patches = jnp.concatenate(cols, axis=-1).reshape(M, K)

    # ---- Pack weights: pad smaller kernel (centered), concat I, reorder --
    def pad_k(w, kkh, kkw):
        dph, dpw = (kh - kkh) // 2, (kw - kkw) // 2
        return jnp.pad(w, ((dph, dph), (dpw, dpw), (0, 0), (0, 0)))

    w_cat = jnp.concatenate([pad_k(wx, kh1, kw1), pad_k(wh, kh2, kw2)], axis=2)
    # PyTorch gate order [i, f, c, o]  ->  kernel order [i, f, o, c]
    perm = jnp.concatenate([jnp.arange(0, 2 * Chid),
                            jnp.arange(3 * Chid, 4 * Chid),
                            jnp.arange(2 * Chid, 3 * Chid)])
    w_pack = jnp.take(w_cat, perm, axis=-1).reshape(K, 4 * Chid)
    b_pack = (bx + bh)[perm].reshape(1, 4 * Chid).astype(jnp.float32)

    # bf16 matmul operands (f32 accumulation in the kernel).
    patches = patches.astype(jnp.bfloat16)
    w_pack = w_pack.astype(jnp.bfloat16)

    # ---- Grid over the flattened row dim (pad M to a block multiple) -----
    bm = min(block_m, _round_up(M, 8))
    Mpad = _round_up(M, bm)
    c2d = c.reshape(M, Chid)
    if Mpad != M:
        patches = jnp.pad(patches, ((0, Mpad - M), (0, 0)))
        c2d = jnp.pad(c2d, ((0, Mpad - M), (0, 0)))

    h2d, c2d_new = pl.pallas_call(
        _convlstm_gate_kernel,
        out_shape=(jax.ShapeDtypeStruct((Mpad, Chid), jnp.float32),
                   jax.ShapeDtypeStruct((Mpad, Chid), jnp.float32)),
        grid=(Mpad // bm,),
        in_specs=[pl.BlockSpec((bm, K), lambda i: (i, 0)),          # patches
                  pl.BlockSpec((bm, Chid), lambda i: (i, 0)),       # c_pre
                  pl.BlockSpec((K, 4 * Chid), lambda i: (0, 0)),    # weights
                  pl.BlockSpec((1, 4 * Chid), lambda i: (0, 0))],   # bias
        out_specs=(pl.BlockSpec((bm, Chid), lambda i: (i, 0)),
                   pl.BlockSpec((bm, Chid), lambda i: (i, 0))),
        compiler_params=pltpu.CompilerParams(
            dimension_semantics=("parallel",),
            vmem_limit_bytes=32 * 1024 * 1024),
    )(patches, c2d, w_pack, b_pack)

    h_new = h2d[:M].reshape(B, H, W, Chid)
    c_new = c2d_new[:M].reshape(B, H, W, Chid)
    return (jnp.transpose(h_new, (0, 3, 1, 2)),
            jnp.transpose(c_new, (0, 3, 1, 2)))


def _ref_forward(x, h_pre, c_pre, wx, bx, wh, bh):
    """Pure-JAX NCHW reference (mirrors the PyTorch forward)."""
    wx_oihw = jnp.transpose(wx, (3, 2, 0, 1))
    wh_oihw = jnp.transpose(wh, (3, 2, 0, 1))
    gx = lax.conv_general_dilated(x, wx_oihw, (1, 1), 'SAME',
                                  dimension_numbers=('NCHW', 'OIHW', 'NCHW'))
    gx = gx + bx.reshape(1, -1, 1, 1)
    gh = lax.conv_general_dilated(h_pre, wh_oihw, (1, 1), 'SAME',
                                  dimension_numbers=('NCHW', 'OIHW', 'NCHW'))
    gh = gh + bh.reshape(1, -1, 1, 1)
    xi, xf, xc, xo = jnp.split(gx, 4, axis=1)
    hi, hf, hc, ho = jnp.split(gh, 4, axis=1)
    i = jax.nn.sigmoid(xi + hi)
    f = jax.nn.sigmoid(xf + hf)
    o = jax.nn.sigmoid(xo + ho)
    c_new = f * c_pre + i * jnp.tanh(xc + hc)
    h = o * jnp.tanh(c_new)
    return h, c_new


if __name__ == "__main__":
    key = jax.random.PRNGKey(0)
    B, Cin, H, W = 2, 4, 16, 16
    hidden = 8
    in2hi_kernel = 3
    hi2hi_kernel = 3

    ks = jax.random.split(key, 7)
    x = jax.random.normal(ks[0], (B, Cin, H, W), jnp.float32)
    h_pre = jax.random.normal(ks[1], (B, hidden, H, W), jnp.float32)
    c_pre = jax.random.normal(ks[2], (B, hidden, H, W), jnp.float32)

    # Deterministic synthetic parameters (HWIO weights, bias per out-channel).
    wx = 0.1 * jax.random.normal(ks[3], (in2hi_kernel, in2hi_kernel, Cin, 4 * hidden), jnp.float32)
    bx = 0.1 * jax.random.normal(ks[4], (4 * hidden,), jnp.float32)
    wh = 0.1 * jax.random.normal(ks[5], (hi2hi_kernel, hi2hi_kernel, hidden, 4 * hidden), jnp.float32)
    bh = 0.1 * jax.random.normal(ks[6], (4 * hidden,), jnp.float32)
    params = dict(wx=wx, bx=bx, wh=wh, bh=bh)

    h_new, c_new = conv_lstm_cell(x, h_pre, c_pre, params)
    jax.block_until_ready((h_new, c_new))

    h_ref, c_ref = _ref_forward(x, h_pre, c_pre, wx, bx, wh, bh)
    assert h_new.shape == (B, hidden, H, W) and c_new.shape == (B, hidden, H, W)
    # bf16 matmul operands -> tolerance relaxed vs the pure-f32 reference.
    assert jnp.allclose(h_new, h_ref, atol=5e-2, rtol=5e-2)
    assert jnp.allclose(c_new, c_ref, atol=5e-2, rtol=5e-2)
    print("KERNEL_OK")
</pallas_src>

<mosaic_0001>
module attributes {stable_mosaic.version = 11 : i64} {
  func.func @_convlstm_gate_kernel(%arg0: i32, %arg1: memref<256x108xbf16, #tpu.memory_space<vmem>>, %arg2: memref<256x8xf32, #tpu.memory_space<vmem>>, %arg3: memref<108x32xbf16, #tpu.memory_space<vmem>>, %arg4: memref<1x32xf32, #tpu.memory_space<vmem>>, %arg5: memref<256x8xf32, #tpu.memory_space<vmem>>, %arg6: memref<256x8xf32, #tpu.memory_space<vmem>>) attributes {dimension_semantics = [#tpu.dimension_semantics<parallel>], iteration_bounds = array<i64: 2>, scalar_prefetch = 0 : i64, scratch_operands = 0 : i64, tpu.core_type = #tpu.core_type<tc>, window_params = [{transform_indices = @transform_0, window_bounds = array<i64: 256, 108>}, {transform_indices = @transform_1, window_bounds = array<i64: 256, 8>}, {pipeline_mode = #tpu.pipeline_mode<synchronous>, transform_indices = @transform_2, window_bounds = array<i64: 108, 32>}, {pipeline_mode = #tpu.pipeline_mode<synchronous>, transform_indices = @transform_3, window_bounds = array<i64: 1, 32>}, {transform_indices = @transform_4, window_bounds = array<i64: 256, 8>}, {transform_indices = @transform_5, window_bounds = array<i64: 256, 8>}]} {
    %c0 = arith.constant 0 : index
    %c0_0 = arith.constant 0 : index
    %0 = vector.load %arg1[%c0, %c0_0] : memref<256x108xbf16, #tpu.memory_space<vmem>>, vector<256x108xbf16>
    %c0_1 = arith.constant 0 : index
    %c0_2 = arith.constant 0 : index
    %1 = vector.load %arg3[%c0_1, %c0_2] : memref<108x32xbf16, #tpu.memory_space<vmem>>, vector<108x32xbf16>
    %cst = arith.constant dense<0.000000e+00> : vector<256x32xf32>
    %2 = tpu.matmul %0, %1, %cst {dimension_numbers = #tpu.dot_dimension_numbers<[1], [0], [0], [1], [0, 0, 1, 1], [], []>} : vector<256x108xbf16>, vector<108x32xbf16>, vector<256x32xf32> -> vector<256x32xf32>
    %c0_3 = arith.constant 0 : index
    %c0_4 = arith.constant 0 : index
    %3 = vector.load %arg4[%c0_3, %c0_4] : memref<1x32xf32, #tpu.memory_space<vmem>>, vector<1x32xf32>
    %4 = vector.broadcast %3 : vector<1x32xf32> to vector<256x32xf32>
    %5 = arith.addf %2, %4 : vector<256x32xf32>
    %6 = vector.extract_strided_slice %5 {offsets = [0, 0], sizes = [256, 24], strides = [1, 1]} : vector<256x32xf32> to vector<256x24xf32>
    %7 = arith.negf %6 : vector<256x24xf32>
    %8 = math.exp %7 : vector<256x24xf32>
    %cst_5 = arith.constant 1.000000e+00 : f32
    %9 = vector.broadcast %cst_5 : f32 to vector<256x24xf32>
    %10 = arith.addf %9, %8 : vector<256x24xf32>
    %11 = arith.divf %9, %10 : vector<256x24xf32>
    %12 = vector.extract_strided_slice %5 {offsets = [0, 24], sizes = [256, 8], strides = [1, 1]} : vector<256x32xf32> to vector<256x8xf32>
    %13 = math.tanh %12 : vector<256x8xf32>
    %14 = vector.extract_strided_slice %11 {offsets = [0, 0], sizes = [256, 8], strides = [1, 1]} : vector<256x24xf32> to vector<256x8xf32>
    %15 = vector.extract_strided_slice %11 {offsets = [0, 8], sizes = [256, 8], strides = [1, 1]} : vector<256x24xf32> to vector<256x8xf32>
    %16 = vector.extract_strided_slice %11 {offsets = [0, 16], sizes = [256, 8], strides = [1, 1]} : vector<256x24xf32> to vector<256x8xf32>
    %c0_6 = arith.constant 0 : index
    %c0_7 = arith.constant 0 : index
    %17 = vector.load %arg2[%c0_6, %c0_7] : memref<256x8xf32, #tpu.memory_space<vmem>>, vector<256x8xf32>
    %18 = arith.mulf %15, %17 : vector<256x8xf32>
    %19 = arith.mulf %14, %13 : vector<256x8xf32>
    %20 = arith.addf %18, %19 : vector<256x8xf32>
    %c0_8 = arith.constant 0 : index
    %c0_9 = arith.constant 0 : index
    %21 = vector.load %arg6[%c0_8, %c0_9] : memref<256x8xf32, #tpu.memory_space<vmem>>, vector<256x8xf32>
    tpu.vector_store %arg6[%c0_8, %c0_9], %20 {strides = array<i32>} : memref<256x8xf32, #tpu.memory_space<vmem>>, vector<256x8xf32>,
    %22 = math.tanh %20 : vector<256x8xf32>
    %23 = arith.mulf %16, %22 : vector<256x8xf32>
    %c0_10 = arith.constant 0 : index
    %c0_11 = arith.constant 0 : index
    %24 = vector.load %arg5[%c0_10, %c0_11] : memref<256x8xf32, #tpu.memory_space<vmem>>, vector<256x8xf32>
    tpu.vector_store %arg5[%c0_10, %c0_11], %23 {strides = array<i32>} : memref<256x8xf32, #tpu.memory_space<vmem>>, vector<256x8xf32>,
    return
  }
  func.func @transform_0(%arg0: i32) -> (i32, i32) {
    %c0_i32 = arith.constant 0 : i32
    %c0_i32_0 = arith.constant 0 : i32
    return %arg0, %c0_i32 : i32, i32
  }
  func.func @transform_1(%arg0: i32) -> (i32, i32) {
    %c0_i32 = arith.constant 0 : i32
    %c0_i32_0 = arith.constant 0 : i32
    return %arg0, %c0_i32 : i32, i32
  }
  func.func @transform_2(%arg0: i32) -> (i32, i32) {
    %c0_i32 = arith.constant 0 : i32
    %c0_i32_0 = arith.constant 0 : i32
    %c0_i32_1 = arith.constant 0 : i32
    return %c0_i32, %c0_i32_0 : i32, i32
  }
  func.func @transform_3(%arg0: i32) -> (i32, i32) {
    %c0_i32 = arith.constant 0 : i32
    %c0_i32_0 = arith.constant 0 : i32
    %c0_i32_1 = arith.constant 0 : i32
    return %c0_i32, %c0_i32_0 : i32, i32
  }
  func.func @transform_4(%arg0: i32) -> (i32, i32) {
    %c0_i32 = arith.constant 0 : i32
    %c0_i32_0 = arith.constant 0 : i32
    return %arg0, %c0_i32 : i32, i32
  }
  func.func @transform_5(%arg0: i32) -> (i32, i32) {
    %c0_i32 = arith.constant 0 : i32
    %c0_i32_0 = arith.constant 0 : i32
    return %arg0, %c0_i32 : i32, i32
  }
}

</mosaic_0001>

<llo_original>
// kernel: tpu_custom_call.1
$region0: #{tpu_custom_call.1}
  #allocation0 [shape = 'u32[]', space=smem, size = 0x4, offset = 0x4, fixed_abs, tag = 'smem constant byte address 0x4 - core index']
  #allocation1 [shape = 'u32[72,128]{1,0:T(1,128)}', space=vmem, size = 0x9000, scoped, tag = 'internal scratch']
  %s0 = inlined_call_operand.vmem [shape: bf16[512,108], index: 0, kind: input, shape index: {}]
  %s1 = inlined_call_operand.vmem [shape: f32[512,8], index: 1, kind: input, shape index: {}]
  %s2 = inlined_call_operand.vmem [shape: bf16[108,32], index: 2, kind: input, shape index: {}]
  %s3 = inlined_call_operand.vmem [shape: f32[1,32], index: 3, kind: input, shape index: {}]
  %s4 = inlined_call_operand.vmem [shape: f32[512,8], index: 4, kind: output, shape index: {0}]
  %s5 = inlined_call_operand.vmem [shape: f32[512,8], index: 5, kind: output, shape index: {1}]
  %6 = xla_tuple %s4, %s5
  %s7 = sld [smem:[#allocation0]]
  $region57: #{tpu_custom_call.1} parent=0
    _
  %s9 = ssub.s32 1, %s7
  %s10 = scalar_select 0, %s9, %s7
  loop: start=0, step=1, limit=4
  $region2: #{tpu_custom_call.1} parent=0 // loop_pre_header
    _
  $region3: #{tpu_custom_call.1} parent=0 // loop_header
    %s12 = sphi 0, %s16
    %p13 = scmp.ge.s32.totalorder %s12, 4
    %s22 = sphi 0, %s24
    %s25 = sphi 0, %s22
    %s26 = sphi 0, %s25
    %s42 = sphi 0, %s26
    %s48 = sphi 0, %s50
    %s51 = sphi 0, %s48
    %s52 = sphi 0, %s51
    %s68 = sphi 0, %s52
    %s72 = sphi 0, %s72
    %s74 = sphi 0, %s72
    %s75 = sphi 0, %s74
    %s89 = sphi 0, %s75
    %s93 = sphi 0, %s93
    %s95 = sphi 0, %s93
    %s96 = sphi 0, %s95
    %s110 = sphi 0, %s96
    %s116 = sphi 0, %s118
    %s119 = sphi 0, %s116
    %s120 = sphi 0, %s119
    %s136 = sphi 0, %s120
    %s142 = sphi 0, %s144
    %s145 = sphi 0, %s142
    %s146 = sphi 0, %s145
    %s162 = sphi 0, %s146
  $region4: #{tpu_custom_call.1} parent=0 // loop_header_branch
    %15 = sbr.rel (%p13) target = $region8
  $region5: #{tpu_custom_call.1} parent=0 // loop_body
    %s17 = ssub.s32 %s12, 1
    %s18 = ssub.s32 %s12, 2
    %s19 = sadd.s32 %s12, 1
    %s20 = ssub.s32 %s12, %s19
    %p21 = scmp.eq.s32.totalorder %s20, 0
    %s23 = sadd.s32 %s22, 1
    %s24 = scalar_select %p21, %s22, %s23
    %p27 = pneg %p21
    %p28 = scmp.eq.s32.totalorder %s12, 1
    %p29 = por %p27, %p28
    %p30 = scmp.ne.s32.totalorder %s22, %s25
    %p31 = scmp.eq.s32.totalorder %s12, 0
    %p32 = por %p30, %p31
    %p33 = scmp.ne.s32.totalorder %s22, %s25
    %p34 = scmp.eq.s32.totalorder %s17, 1
    %p35 = por %p33, %p34
    %p36 = scmp.ne.s32.totalorder %s25, %s26
    %p37 = scmp.eq.s32.totalorder %s17, 0
    %p38 = por %p36, %p37
    %p39 = scmp.ne.s32.totalorder %s25, %s26
    %p40 = scmp.eq.s32.totalorder %s18, 1
    %p41 = por %p39, %p40
    %p43 = scmp.ne.s32.totalorder %s26, %s42
    %p44 = scmp.eq.s32.totalorder %s18, 0
    %p45 = por %p43, %p44
    %s46 = ssub.s32 %s12, %s19
    %p47 = scmp.eq.s32.totalorder %s46, 0
    %s49 = sadd.s32 %s48, 1
    %s50 = scalar_select %p47, %s48, %s49
    %p53 = pneg %p47
    %p54 = scmp.eq.s32.totalorder %s12, 1
    %p55 = por %p53, %p54
    %p56 = scmp.ne.s32.totalorder %s48, %s51
    %p57 = scmp.eq.s32.totalorder %s12, 0
    %p58 = por %p56, %p57
    %p59 = scmp.ne.s32.totalorder %s48, %s51
    %p60 = scmp.eq.s32.totalorder %s17, 1
    %p61 = por %p59, %p60
    %p62 = scmp.ne.s32.totalorder %s51, %s52
    %p63 = scmp.eq.s32.totalorder %s17, 0
    %p64 = por %p62, %p63
    %p65 = scmp.ne.s32.totalorder %s51, %s52
    %p66 = scmp.eq.s32.totalorder %s18, 1
    %p67 = por %p65, %p66
    %p69 = scmp.ne.s32.totalorder %s52, %s68
    %p70 = scmp.eq.s32.totalorder %s18, 0
    %p71 = por %p69, %p70
    %s73 = sadd.s32 %s72, 1
    %p76 = scmp.eq.s32.totalorder %s12, 1
    %p77 = scmp.ne.s32.totalorder %s72, %s74
    %p78 = scmp.eq.s32.totalorder %s12, 0
    %p79 = por %p77, %p78
    %p80 = scmp.ne.s32.totalorder %s72, %s74
    %p81 = scmp.eq.s32.totalorder %s17, 1
    %p82 = por %p80, %p81
    %p83 = scmp.ne.s32.totalorder %s74, %s75
    %p84 = scmp.eq.s32.totalorder %s17, 0
    %p85 = por %p83, %p84
    %p86 = scmp.ne.s32.totalorder %s74, %s75
    %p87 = scmp.eq.s32.totalorder %s18, 1
    %p88 = por %p86, %p87
    %p90 = scmp.ne.s32.totalorder %s75, %s89
    %p91 = scmp.eq.s32.totalorder %s18, 0
    %p92 = por %p90, %p91
    %s94 = sadd.s32 %s93, 1
    %p97 = scmp.eq.s32.totalorder %s12, 1
    %p98 = scmp.ne.s32.totalorder %s93, %s95
    %p99 = scmp.eq.s32.totalorder %s12, 0
    %p100 = por %p98, %p99
    %p101 = scmp.ne.s32.totalorder %s93, %s95
    %p102 = scmp.eq.s32.totalorder %s17, 1
    %p103 = por %p101, %p102
    %p104 = scmp.ne.s32.totalorder %s95, %s96
    %p105 = scmp.eq.s32.totalorder %s17, 0
    %p106 = por %p104, %p105
    %p107 = scmp.ne.s32.totalorder %s95, %s96
    %p108 = scmp.eq.s32.totalorder %s18, 1
    %p109 = por %p107, %p108
    %p111 = scmp.ne.s32.totalorder %s96, %s110
    %p112 = scmp.eq.s32.totalorder %s18, 0
    %p113 = por %p111, %p112
    %s114 = ssub.s32 %s12, %s19
    %p115 = scmp.eq.s32.totalorder %s114, 0
    %s117 = sadd.s32 %s116, 1
    %s118 = scalar_select %p115, %s116, %s117
    %p121 = pneg %p115
    %p122 = scmp.eq.s32.totalorder %s12, 1
    %p123 = por %p121, %p122
    %p124 = scmp.ne.s32.totalorder %s116, %s119
    %p125 = scmp.eq.s32.totalorder %s12, 0
    %p126 = por %p124, %p125
    %p127 = scmp.ne.s32.totalorder %s116, %s119
    %p128 = scmp.eq.s32.totalorder %s17, 1
    %p129 = por %p127, %p128
    %p130 = scmp.ne.s32.totalorder %s119, %s120
    %p131 = scmp.eq.s32.totalorder %s17, 0
    %p132 = por %p130, %p131
    %p133 = scmp.ne.s32.totalorder %s119, %s120
    %p134 = scmp.eq.s32.totalorder %s18, 1
    %p135 = por %p133, %p134
    %p137 = scmp.ne.s32.totalorder %s120, %s136
    %p138 = scmp.eq.s32.totalorder %s18, 0
    %p139 = por %p137, %p138
    %s140 = ssub.s32 %s12, %s19
    %p141 = scmp.eq.s32.totalorder %s140, 0
    %s143 = sadd.s32 %s142, 1
    %s144 = scalar_select %p141, %s142, %s143
    %p147 = pneg %p141
    %p148 = scmp.eq.s32.totalorder %s12, 1
    %p149 = por %p147, %p148
    %p150 = scmp.ne.s32.totalorder %s142, %s145
    %p151 = scmp.eq.s32.totalorder %s12, 0
    %p152 = por %p150, %p151
    %p153 = scmp.ne.s32.totalorder %s142, %s145
    %p154 = scmp.eq.s32.totalorder %s17, 1
    %p155 = por %p153, %p154
    %p156 = scmp.ne.s32.totalorder %s145, %s146
    %p157 = scmp.eq.s32.totalorder %s17, 0
    %p158 = por %p156, %p157
    %p159 = scmp.ne.s32.totalorder %s145, %s146
    %p160 = scmp.eq.s32.totalorder %s18, 1
    %p161 = por %p159, %p160
    %p163 = scmp.ne.s32.totalorder %s146, %s162
    %p164 = scmp.eq.s32.totalorder %s18, 0
    %p165 = por %p163, %p164
    %p166 = scmp.le.s32.totalorder 1, %s12
    %p167 = scmp.lt.s32.totalorder %s12, 3
    %p168 = pnand %p166, %p167
    %p169 = pneg %p168
    // Predicated region
    $region9: #{tpu_custom_call.1} parent=5 // pred_check
      _
    $region10: #{tpu_custom_call.1} parent=5 // pred_check_branch
      %171 = sbr.rel (%p168) target = $region12
    $region11: #{tpu_custom_call.1} parent=5 // pred_region
      %s172 = ssub.s32 %s12, 1
      // Predicated region
      $region13: #{tpu_custom_call.1} parent=11 // pred_check
        %p173 = pneg %p85
      $region14: #{tpu_custom_call.1} parent=11 // pred_check_branch
        %175 = sbr.rel (%p173) target = $region16
      $region15: #{tpu_custom_call.1} parent=11 // pred_region
        _
      $region16: #{tpu_custom_call.1} parent=11 // pred_fallthru
        _
      // Predicated region
      $region17: #{tpu_custom_call.1} parent=11 // pred_check
        %p176 = pneg %p106
      $region18: #{tpu_custom_call.1} parent=11 // pred_check_branch
        %178 = sbr.rel (%p176) target = $region20
      $region19: #{tpu_custom_call.1} parent=11 // pred_region
        _
      $region20: #{tpu_custom_call.1} parent=11 // pred_fallthru
        _
    $region12: #{tpu_custom_call.1} parent=5 // pred_fallthru
      _
    %p179 = scmp.lt.s32.totalorder %s12, 2
    // Predicated region
    $region21: #{tpu_custom_call.1} parent=5 // pred_check
      %p180 = pneg %p179
    $region22: #{tpu_custom_call.1} parent=5 // pred_check_branch
      %182 = sbr.rel (%p180) target = $region24
    $region23: #{tpu_custom_call.1} parent=5 // pred_region
      // Predicated region
      $region25: #{tpu_custom_call.1} parent=23 // pred_check
        %p183 = pneg %p32
      $region26: #{tpu_custom_call.1} parent=23 // pred_check_branch
        %185 = sbr.rel (%p183) target = $region28
      $region27: #{tpu_custom_call.1} parent=23 // pred_region
        %s186 = smul.u32 32, %s12
        %p187 = scmp.lt.s32.totalorder %s186, 63
        %s188 = scalar_select %p187, %s186, 63
        %s189 = smul.addr %s188, 4
        %s190 = scalar_lea.vmem %s0, %s189
        %s191 = smul.u32 32, %s12
      $region28: #{tpu_custom_call.1} parent=23 // pred_fallthru
        _
      // Predicated region
      $region29: #{tpu_custom_call.1} parent=23 // pred_check
        %p192 = pneg %p58
      $region30: #{tpu_custom_call.1} parent=23 // pred_check_branch
        %194 = sbr.rel (%p192) target = $region32
      $region31: #{tpu_custom_call.1} parent=23 // pred_region
        %s195 = smul.u32 32, %s12
        %p196 = scmp.lt.s32.totalorder %s195, 63
        %s197 = scalar_select %p196, %s195, 63
        %s198 = smul.addr %s197, 8
        %s199 = scalar_lea.vmem %s1, %s198
        %s200 = smul.u32 32, %s12
      $region32: #{tpu_custom_call.1} parent=23 // pred_fallthru
        _
    $region24: #{tpu_custom_call.1} parent=5 // pred_fallthru
      _
    %p201 = scmp.le.s32.totalorder 1, %s12
    %p202 = scmp.lt.s32.totalorder %s12, 3
    %p203 = pnand %p201, %p202
    %p204 = pneg %p203
    // Predicated region
    $region33: #{tpu_custom_call.1} parent=5 // pred_check
      _
    $region34: #{tpu_custom_call.1} parent=5 // pred_check_branch
      %206 = sbr.rel (%p203) target = $region36
    $region35: #{tpu_custom_call.1} parent=5 // pred_region
      %s207 = ssub.s32 %s12, 1
      %s208 = smul.u32 32, %s17
      %p209 = scmp.lt.s32.totalorder %s208, 63
      %s210 = scalar_select %p209, %s208, 63
      %s211 = smul.addr %s210, 4
      %s212 = scalar_lea.vmem %s0, %s211
      %p213 = pneg %p38
      %p214 = pneg %p35
      %s215 = smul.u32 32, %s17
      %p216 = scmp.lt.s32.totalorder %s215, 63
      %s217 = scalar_select %p216, %s215, 63
      %s218 = smul.addr %s217, 8
      %s219 = scalar_lea.vmem %s1, %s218
      %p220 = pneg %p64
      %p221 = pneg %p61
      %p222 = pneg %p85
      %p223 = pneg %p82
      %p224 = pneg %p106
      %p225 = pneg %p103
      %p226 = pneg %p132
      %p227 = pneg %p129
      %s228 = smul.u32 32, %s17
      %p229 = scmp.lt.s32.totalorder %s228, 63
      %s230 = scalar_select %p229, %s228, 63
      %s231 = smul.addr %s230, 8
      %s232 = scalar_lea.vmem %s4, %s231
      %p233 = pneg %p158
      %p234 = pneg %p155
      %s235 = smul.u32 32, %s17
      %p236 = scmp.lt.s32.totalorder %s235, 63
      %s237 = scalar_select %p236, %s235, 63
      %s238 = smul.addr %s237, 8
      %s239 = scalar_lea.vmem %s5, %s238
      %s240 = smul.u32 32, %s17
      %p241 = scmp.lt.s32.totalorder %s240, 63
      %s242 = scalar_select %p241, %s240, 63
      %s243 = smul.addr %s242, 4
      %s244 = scalar_lea.vmem %s0, %s243
      %s245 = smul.u32 32, %s17
      %s246 = smul.u32 32, %s17
      %p247 = scmp.lt.s32.totalorder %s246, 63
      %s248 = scalar_select %p247, %s246, 63
      %s249 = smul.addr %s248, 8
      %s250 = scalar_lea.vmem %s1, %s249
      %s251 = smul.u32 32, %s17
      %s252 = smul.u32 32, %s17
      %p253 = scmp.lt.s32.totalorder %s252, 63
      %s254 = scalar_select %p253, %s252, 63
      %s255 = smul.addr %s254, 8
      %s256 = scalar_lea.vmem %s4, %s255
      %s257 = smul.u32 32, %s17
      %s258 = smul.u32 32, %s17
      %p259 = scmp.lt.s32.totalorder %s258, 63
      %s260 = scalar_select %p259, %s258, 63
      %s261 = smul.addr %s260, 8
      %s262 = scalar_lea.vmem %s5, %s261
      %s263 = smul.u32 32, %s17
      %v265 = vld [vmem:[%s244] sm:$0xf]
      %v266 = vld [vmem:[%s244 + $0x4] sm:$0xf]
      %v267 = vld [vmem:[%s244 + $0x8] sm:$0xf]
      %v268 = vld [vmem:[%s244 + $0xc] sm:$0xf]
      %v269 = vld [vmem:[%s244 + $0x10] sm:$0xf]
      %v270 = vld [vmem:[%s244 + $0x14] sm:$0xf]
      %v271 = vld [vmem:[%s244 + $0x18] sm:$0xf]
      %v272 = vld [vmem:[%s244 + $0x1c] sm:$0xf]
      %v273 = vld [vmem:[%s244 + $0x20] sm:$0xf]
      %v274 = vld [vmem:[%s244 + $0x24] sm:$0xf]
      %v275 = vld [vmem:[%s244 + $0x28] sm:$0xf]
      %v276 = vld [vmem:[%s244 + $0x2c] sm:$0xf]
      %v277 = vld [vmem:[%s244 + $0x30] sm:$0xf]
      %v278 = vld [vmem:[%s244 + $0x34] sm:$0xf]
      %v279 = vld [vmem:[%s244 + $0x38] sm:$0xf]
      %v280 = vld [vmem:[%s244 + $0x3c] sm:$0xf]
      %v281 = vld [vmem:[%s244 + $0x40] sm:$0xf]
      %v282 = vld [vmem:[%s244 + $0x44] sm:$0xf]
      %v283 = vld [vmem:[%s244 + $0x48] sm:$0xf]
      %v284 = vld [vmem:[%s244 + $0x4c] sm:$0xf]
      %v285 = vld [vmem:[%s244 + $0x50] sm:$0xf]
      %v286 = vld [vmem:[%s244 + $0x54] sm:$0xf]
      %v287 = vld [vmem:[%s244 + $0x58] sm:$0xf]
      %v288 = vld [vmem:[%s244 + $0x5c] sm:$0xf]
      %v289 = vld [vmem:[%s244 + $0x60] sm:$0xf]
      %v290 = vld [vmem:[%s244 + $0x64] sm:$0xf]
      %v291 = vld [vmem:[%s244 + $0x68] sm:$0xf]
      %v292 = vld [vmem:[%s244 + $0x6c] sm:$0xf]
      %v293 = vld [vmem:[%s244 + $0x70] sm:$0xf]
      %v294 = vld [vmem:[%s244 + $0x74] sm:$0xf]
      %v295 = vld [vmem:[%s244 + $0x78] sm:$0xf]
      %v296 = vld [vmem:[%s244 + $0x7c] sm:$0xf]
      %v297 = vld [vmem:[%s2] sm:$0xf]
      %v298 = vld [vmem:[%s2 + $0x4] sm:$0xf]
      %v299 = vld [vmem:[%s2 + $0x8] sm:$0xf]
      %v300 = vld [vmem:[%s2 + $0xc] sm:$0xf]
      %v301 = vld [vmem:[%s2 + $0x10] sm:$0xf]
      %v302 = vld [vmem:[%s2 + $0x14] sm:$0xf]
      %v303 = vld [vmem:[%s2 + $0x18] sm:$0xf]
      %v304 = vld [vmem:[%s2 + $0x1c] sm:$0xf]
      %v305 = vld [vmem:[%s2 + $0x20] sm:$0xf]
      %v306 = vld [vmem:[%s2 + $0x24] sm:$0xf]
      %v307 = vld [vmem:[%s2 + $0x28] sm:$0xf]
      %v308 = vld [vmem:[%s2 + $0x2c] sm:$0xf]
      %v309 = vld [vmem:[%s2 + $0x30] sm:$0xf]
      %v310 = vld [vmem:[%s2 + $0x34] sm:$0x3]
      %v311 = vld [vmem:[%s3] sm:$0x1]
      %v313 = vperm.slane %v311, 0
      %v347 = vunpack.c.l.b16 %v265
      %v348 = vunpack.c.l.b16 %v266
      %v349 = vunpack.c.l.b16 %v267
      %v350 = vunpack.c.l.b16 %v268
      %v351 = vunpack.c.l.b16 %v269
      %v352 = vunpack.c.l.b16 %v270
      %v353 = vunpack.c.l.b16 %v271
      %v354 = vunpack.c.l.b16 %v272
      %v355 = vunpack.c.l.b16 %v273
      %v356 = vunpack.c.l.b16 %v274
      %v357 = vunpack.c.l.b16 %v275
      %v358 = vunpack.c.l.b16 %v276
      %v359 = vunpack.c.l.b16 %v277
      %v360 = vunpack.c.l.b16 %v278
      %v361 = vunpack.c.l.b16 %v279
      %v362 = vunpack.c.l.b16 %v280
      %v363 = vunpack.c.l.b16 %v281
      %v364 = vunpack.c.l.b16 %v282
      %v365 = vunpack.c.l.b16 %v283
      %v366 = vunpack.c.l.b16 %v284
      %v367 = vunpack.c.l.b16 %v285
      %v368 = vunpack.c.l.b16 %v286
      %v369 = vunpack.c.l.b16 %v287
      %v370 = vunpack.c.l.b16 %v288
      %v371 = vunpack.c.l.b16 %v289
      %v372 = vunpack.c.l.b16 %v290
      %v373 = vunpack.c.l.b16 %v291
      %v374 = vunpack.c.l.b16 %v292
      %v375 = vunpack.c.l.b16 %v293
      %v376 = vunpack.c.l.b16 %v294
      %v377 = vunpack.c.l.b16 %v295
      %v378 = vunpack.c.l.b16 %v296
      %v379 = vpack.c.b16 %v348, %v347
      %v380 = vpack.c.b16 %v350, %v349
      %v381 = vpack.c.b16 %v352, %v351
      %v382 = vpack.c.b16 %v354, %v353
      %v383 = vpack.c.b16 %v356, %v355
      %v384 = vpack.c.b16 %v358, %v357
      %v385 = vpack.c.b16 %v360, %v359
      %v386 = vpack.c.b16 %v362, %v361
      %v387 = vpack.c.b16 %v364, %v363
      %v388 = vpack.c.b16 %v366, %v365
      %v389 = vpack.c.b16 %v368, %v367
      %v390 = vpack.c.b16 %v370, %v369
      %v391 = vpack.c.b16 %v372, %v371
      %v392 = vpack.c.b16 %v374, %v373
      %v393 = vpack.c.b16 %v376, %v375
      %v394 = vpack.c.b16 %v378, %v377
      %v409 = vunpack.c.l.b16 %v297
      %v410 = vunpack.c.l.b16 %v298
      %v411 = vunpack.c.l.b16 %v299
      %v412 = vunpack.c.l.b16 %v300
      %v413 = vunpack.c.l.b16 %v301
      %v414 = vunpack.c.l.b16 %v302
      %v415 = vunpack.c.l.b16 %v303
      %v416 = vunpack.c.l.b16 %v304
      %v417 = vunpack.c.l.b16 %v305
      %v418 = vunpack.c.l.b16 %v306
      %v419 = vunpack.c.l.b16 %v307
      %v420 = vunpack.c.l.b16 %v308
      %v421 = vunpack.c.l.b16 %v309
      %v422 = vunpack.c.l.b16 %v310
      %v423 = vpack.c.b16 %v410, %v409
      %v424 = vpack.c.b16 %v412, %v411
      %v425 = vpack.c.b16 %v414, %v413
      %v426 = vpack.c.b16 %v416, %v415
      %v427 = vpack.c.b16 %v418, %v417
      %v428 = vpack.c.b16 %v420, %v419
      %v429 = vpack.c.b16 %v422, %v421
      %vm436 = vcmask 883712
      %v438 = vsel %vm436, %v379, 0
      %v441 = vsel %vm436, %v380, 0
      %v444 = vsel %vm436, %v381, 0
      %v447 = vsel %vm436, %v382, 0
      %v450 = vsel %vm436, %v383, 0
      %v453 = vsel %vm436, %v384, 0
      %v456 = vsel %vm436, %v385, 0
      %v459 = vsel %vm436, %v386, 0
      %v462 = vsel %vm436, %v387, 0
      %v465 = vsel %vm436, %v388, 0
      %v468 = vsel %vm436, %v389, 0
      %v471 = vsel %vm436, %v390, 0
      %v474 = vsel %vm436, %v391, 0
      %v477 = vsel %vm436, %v392, 0
      %v480 = vsel %vm436, %v393, 0
      %v483 = vsel %vm436, %v394, 0
      %vm485 = vcmask 1045504
      %v487 = vsel %vm485, %v429, 0
      %489 = vmatpush.bf16.msra.mxu0 0
      %490 = vmatpush.bf16.msra.mxu0 %v487
      %491 = vmatpush.bf16.msra.mxu0 %v428
      %492 = vmatpush.bf16.msra.mxu0 %v427
      %493 = vmatpush.bf16.msra.mxu0 %v426
      %494 = vmatpush.bf16.msra.mxu0 %v425
      %495 = vmatpush.bf16.msra.mxu0 %v424
      %496 = vmatpush.bf16.msra.mxu0 %v423
      %497 = vmatmul.bf16.gmra.mxu0 %v438
      %v498 = vpop.f32.mrf.mxu0
      %v499 = vadd.f32 %v313, %v498
      %v500 = vpop.f32.mrf.mxu0
      %v501 = vadd.f32 %v313, %v500
      %502 = vmatmul.bf16.gmra.mxu0 %v441
      %v503 = vpop.f32.mrf.mxu0
      %v504 = vadd.f32 %v313, %v503
      %v505 = vpop.f32.mrf.mxu0
      %v506 = vadd.f32 %v313, %v505
      %507 = vmatmul.bf16.gmra.mxu0 %v444
      %v508 = vpop.f32.mrf.mxu0
      %v509 = vadd.f32 %v313, %v508
      %v510 = vpop.f32.mrf.mxu0
      %v511 = vadd.f32 %v313, %v510
      %512 = vmatmul.bf16.gmra.mxu0 %v447
      %v513 = vpop.f32.mrf.mxu0
      %v514 = vadd.f32 %v313, %v513
      %v515 = vpop.f32.mrf.mxu0
      %v516 = vadd.f32 %v313, %v515
      %517 = vmatmul.bf16.gmra.mxu0 %v450
      %v518 = vpop.f32.mrf.mxu0
      %v519 = vadd.f32 %v313, %v518
      %v520 = vpop.f32.mrf.mxu0
      %v521 = vadd.f32 %v313, %v520
      %522 = vmatmul.bf16.gmra.mxu0 %v453
      %v523 = vpop.f32.mrf.mxu0
      %v524 = vadd.f32 %v313, %v523
      %v525 = vpop.f32.mrf.mxu0
      %v526 = vadd.f32 %v313, %v525
      %527 = vmatmul.bf16.gmra.mxu0 %v456
      %v528 = vpop.f32.mrf.mxu0
      %v529 = vadd.f32 %v313, %v528
      %v530 = vpop.f32.mrf.mxu0
      %v531 = vadd.f32 %v313, %v530
      %532 = vmatmul.bf16.gmra.mxu0 %v459
      %v533 = vpop.f32.mrf.mxu0
      %v534 = vadd.f32 %v313, %v533
      %v535 = vpop.f32.mrf.mxu0
      %v536 = vadd.f32 %v313, %v535
      %537 = vmatmul.bf16.gmra.mxu0 %v462
      %v538 = vpop.f32.mrf.mxu0
      %v539 = vadd.f32 %v313, %v538
      %v540 = vpop.f32.mrf.mxu0
      %v541 = vadd.f32 %v313, %v540
      %542 = vmatmul.bf16.gmra.mxu0 %v465
      %v543 = vpop.f32.mrf.mxu0
      %v544 = vadd.f32 %v313, %v543
      %v545 = vpop.f32.mrf.mxu0
      %v546 = vadd.f32 %v313, %v545
      %547 = vmatmul.bf16.gmra.mxu0 %v468
      %v548 = vpop.f32.mrf.mxu0
      %v549 = vadd.f32 %v313, %v548
      %v550 = vpop.f32.mrf.mxu0
      %v551 = vadd.f32 %v313, %v550
      %552 = vmatmul.bf16.gmra.mxu0 %v471
      %v553 = vpop.f32.mrf.mxu0
      %v554 = vadd.f32 %v313, %v553
      %v555 = vpop.f32.mrf.mxu0
      %v556 = vadd.f32 %v313, %v555
      %557 = vmatmul.bf16.gmra.mxu0 %v474
      %v558 = vpop.f32.mrf.mxu0
      %v559 = vadd.f32 %v313, %v558
      %v560 = vpop.f32.mrf.mxu0
      %v561 = vadd.f32 %v313, %v560
      %562 = vmatmul.bf16.gmra.mxu0 %v477
      %v563 = vpop.f32.mrf.mxu0
      %v564 = vadd.f32 %v313, %v563
      %v565 = vpop.f32.mrf.mxu0
      %v566 = vadd.f32 %v313, %v565
      %567 = vmatmul.bf16.gmra.mxu0 %v480
      %v568 = vpop.f32.mrf.mxu0
      %v569 = vadd.f32 %v313, %v568
      %v570 = vpop.f32.mrf.mxu0
      %v571 = vadd.f32 %v313, %v570
      %572 = vmatmul.bf16.gmra.mxu0 %v483
      %v573 = vpop.f32.mrf.mxu0
      %v574 = vadd.f32 %v313, %v573
      %v575 = vpop.f32.mrf.mxu0
      %v576 = vadd.f32 %v313, %v575
      %577 = vdwg.mxu0
      %v578 = vxor.u32 %v499, 2147483648
      %v579 = vxor.u32 %v501, 2147483648
      %v580 = vxor.u32 %v504, 2147483648
      %v581 = vxor.u32 %v506, 2147483648
      %v582 = vxor.u32 %v509, 2147483648
      %v583 = vxor.u32 %v511, 2147483648
      %v584 = vxor.u32 %v514, 2147483648
      %v585 = vxor.u32 %v516, 2147483648
      %v586 = vxor.u32 %v519, 2147483648
      %v587 = vxor.u32 %v521, 2147483648
      %v588 = vxor.u32 %v524, 2147483648
      %v589 = vxor.u32 %v526, 2147483648
      %v590 = vxor.u32 %v529, 2147483648
      %v591 = vxor.u32 %v531, 2147483648
      %v592 = vxor.u32 %v534, 2147483648
      %v593 = vxor.u32 %v536, 2147483648
      %v594 = vxor.u32 %v539, 2147483648
      %v595 = vxor.u32 %v541, 2147483648
      %v596 = vxor.u32 %v544, 2147483648
      %v597 = vxor.u32 %v546, 2147483648
      %v598 = vxor.u32 %v549, 2147483648
      %v599 = vxor.u32 %v551, 2147483648
      %v600 = vxor.u32 %v554, 2147483648
      %v601 = vxor.u32 %v556, 2147483648
      %v602 = vxor.u32 %v559, 2147483648
      %v603 = vxor.u32 %v561, 2147483648
      %v604 = vxor.u32 %v564, 2147483648
      %v605 = vxor.u32 %v566, 2147483648
      %v606 = vxor.u32 %v569, 2147483648
      %v607 = vxor.u32 %v571, 2147483648
      %v608 = vxor.u32 %v574, 2147483648
      %v609 = vxor.u32 %v576, 2147483648
      %v610 = vmul.f32 %v578, 1.442695
      %v611 = vpow.pop %v610
      %v612 = vmul.f32 %v579, 1.442695
      %v613 = vpow.pop %v612
      %v614 = vmul.f32 %v580, 1.442695
      %v615 = vpow.pop %v614
      %v616 = vmul.f32 %v581, 1.442695
      %v617 = vpow.pop %v616
      %v618 = vmul.f32 %v582, 1.442695
      %v619 = vpow.pop %v618
      %v620 = vmul.f32 %v583, 1.442695
      %v621 = vpow.pop %v620
      %v622 = vmul.f32 %v584, 1.442695
      %v623 = vpow.pop %v622
      %v624 = vmul.f32 %v585, 1.442695
      %v625 = vpow.pop %v624
      %v626 = vmul.f32 %v586, 1.442695
      %v627 = vpow.pop %v626
      %v628 = vmul.f32 %v587, 1.442695
      %v629 = vpow.pop %v628
      %v630 = vmul.f32 %v588, 1.442695
      %v631 = vpow.pop %v630
      %v632 = vmul.f32 %v589, 1.442695
      %v633 = vpow.pop %v632
      %v634 = vmul.f32 %v590, 1.442695
      %v635 = vpow.pop %v634
      %v636 = vmul.f32 %v591, 1.442695
      %v637 = vpow.pop %v636
      %v638 = vmul.f32 %v592, 1.442695
      %v639 = vpow.pop %v638
      %v640 = vmul.f32 %v593, 1.442695
      %v641 = vpow.pop %v640
      %v642 = vmul.f32 %v594, 1.442695
      %v643 = vpow.pop %v642
      %v644 = vmul.f32 %v595, 1.442695
      %v645 = vpow.pop %v644
      %v646 = vmul.f32 %v596, 1.442695
      %v647 = vpow.pop %v646
      %v648 = vmul.f32 %v597, 1.442695
      %v649 = vpow.pop %v648
      %v650 = vmul.f32 %v598, 1.442695
      %v651 = vpow.pop %v650
      %v652 = vmul.f32 %v599, 1.442695
      %v653 = vpow.pop %v652
      %v654 = vmul.f32 %v600, 1.442695
      %v655 = vpow.pop %v654
      %v656 = vmul.f32 %v601, 1.442695
      %v657 = vpow.pop %v656
      %v658 = vmul.f32 %v602, 1.442695
      %v659 = vpow.pop %v658
      %v660 = vmul.f32 %v603, 1.442695
      %v661 = vpow.pop %v660
      %v662 = vmul.f32 %v604, 1.442695
      %v663 = vpow.pop %v662
      %v664 = vmul.f32 %v605, 1.442695
      %v665 = vpow.pop %v664
      %v666 = vmul.f32 %v606, 1.442695
      %v667 = vpow.pop %v666
      %v668 = vmul.f32 %v607, 1.442695
      %v669 = vpow.pop %v668
      %v670 = vmul.f32 %v608, 1.442695
      %v671 = vpow.pop %v670
      %v672 = vmul.f32 %v609, 1.442695
      %v673 = vpow.pop %v672
      %v674 = vadd.f32 %v611, 1.0
      %v675 = vadd.f32 %v613, 1.0
      %v676 = vadd.f32 %v615, 1.0
      %v677 = vadd.f32 %v617, 1.0
      %v678 = vadd.f32 %v619, 1.0
      %v679 = vadd.f32 %v621, 1.0
      %v680 = vadd.f32 %v623, 1.0
      %v681 = vadd.f32 %v625, 1.0
      %v682 = vadd.f32 %v627, 1.0
      %v683 = vadd.f32 %v629, 1.0
      %v684 = vadd.f32 %v631, 1.0
      %v685 = vadd.f32 %v633, 1.0
      %v686 = vadd.f32 %v635, 1.0
      %v687 = vadd.f32 %v637, 1.0
      %v688 = vadd.f32 %v639, 1.0
      %v689 = vadd.f32 %v641, 1.0
      %v690 = vadd.f32 %v643, 1.0
      %v691 = vadd.f32 %v645, 1.0
      %v692 = vadd.f32 %v647, 1.0
      %v693 = vadd.f32 %v649, 1.0
      %v694 = vadd.f32 %v651, 1.0
      %v695 = vadd.f32 %v653, 1.0
      %v696 = vadd.f32 %v655, 1.0
      %v697 = vadd.f32 %v657, 1.0
      %v698 = vadd.f32 %v659, 1.0
      %v699 = vadd.f32 %v661, 1.0
      %v700 = vadd.f32 %v663, 1.0
      %v701 = vadd.f32 %v665, 1.0
      %v702 = vadd.f32 %v667, 1.0
      %v703 = vadd.f32 %v669, 1.0
      %v704 = vadd.f32 %v671, 1.0
      %v705 = vadd.f32 %v673, 1.0
      %v706 = vrcp.pop %v674
      %v707 = vmul.f32 %v674, %v706
      %v708 = vsub.f32 1.0, %v707
      %v709 = vmul.f32 %v706, %v708
      %v710 = vadd.f32 %v706, %v709
      %vm711 = vweird.f32 %v674
      %vm712 = vweird.f32 %v706
      %vm713 = vmor %vm711, %vm712
      %v714 = vsel %vm713, %v706, %v710
      %v715 = vand.u32 2147483647, %v674
      %vm716 = vcmp.eq.f32.partialorder %v715, 8.507059e+37
      %v717 = vand.u32 %v674, 2147483648
      %v718 = vor.u32 1.1754944e-38, %v717
      %v719 = vsel %vm716, %v718, %v714
      %v720 = vmul.f32 1.0, %v719
      %v721 = vrcp.pop %v675
      %v722 = vmul.f32 %v675, %v721
      %v723 = vsub.f32 1.0, %v722
      %v724 = vmul.f32 %v721, %v723
      %v725 = vadd.f32 %v721, %v724
      %vm726 = vweird.f32 %v675
      %vm727 = vweird.f32 %v721
      %vm728 = vmor %vm726, %vm727
      %v729 = vsel %vm728, %v721, %v725
      %v730 = vand.u32 2147483647, %v675
      %vm731 = vcmp.eq.f32.partialorder %v730, 8.507059e+37
      %v732 = vand.u32 %v675, 2147483648
      %v733 = vor.u32 1.1754944e-38, %v732
      %v734 = vsel %vm731, %v733, %v729
      %v735 = vmul.f32 1.0, %v734
      %v736 = vrcp.pop %v676
      %v737 = vmul.f32 %v676, %v736
      %v738 = vsub.f32 1.0, %v737
      %v739 = vmul.f32 %v736, %v738
      %v740 = vadd.f32 %v736, %v739
      %vm741 = vweird.f32 %v676
      %vm742 = vweird.f32 %v736
      %vm743 = vmor %vm741, %vm742
      %v744 = vsel %vm743, %v736, %v740
      %v745 = vand.u32 2147483647, %v676
      %vm746 = vcmp.eq.f32.partialorder %v745, 8.507059e+37
      %v747 = vand.u32 %v676, 2147483648
      %v748 = vor.u32 1.1754944e-38, %v747
      %v749 = vsel %vm746, %v748, %v744
      %v750 = vmul.f32 1.0, %v749
      %v751 = vrcp.pop %v677
      %v752 = vmul.f32 %v677, %v751
      %v753 = vsub.f32 1.0, %v752
      %v754 = vmul.f32 %v751, %v753
      %v755 = vadd.f32 %v751, %v754
      %vm756 = vweird.f32 %v677
      %vm757 = vweird.f32 %v751
      %vm758 = vmor %vm756, %vm757
      %v759 = vsel %vm758, %v751, %v755
      %v760 = vand.u32 2147483647, %v677
      %vm761 = vcmp.eq.f32.partialorder %v760, 8.507059e+37
      %v762 = vand.u32 %v677, 2147483648
      %v763 = vor.u32 1.1754944e-38, %v762
      %v764 = vsel %vm761, %v763, %v759
      %v765 = vmul.f32 1.0, %v764
      %v766 = vrcp.pop %v678
      %v767 = vmul.f32 %v678, %v766
      %v768 = vsub.f32 1.0, %v767
      %v769 = vmul.f32 %v766, %v768
      %v770 = vadd.f32 %v766, %v769
      %vm771 = vweird.f32 %v678
      %vm772 = vweird.f32 %v766
      %vm773 = vmor %vm771, %vm772
      %v774 = vsel %vm773, %v766, %v770
      %v775 = vand.u32 2147483647, %v678
      %vm776 = vcmp.eq.f32.partialorder %v775, 8.507059e+37
      %v777 = vand.u32 %v678, 2147483648
      %v778 = vor.u32 1.1754944e-38, %v777
      %v779 = vsel %vm776, %v778, %v774
      %v780 = vmul.f32 1.0, %v779
      %v781 = vrcp.pop %v679
      %v782 = vmul.f32 %v679, %v781
      %v783 = vsub.f32 1.0, %v782
      %v784 = vmul.f32 %v781, %v783
      %v785 = vadd.f32 %v781, %v784
      %vm786 = vweird.f32 %v679
      %vm787 = vweird.f32 %v781
      %vm788 = vmor %vm786, %vm787
      %v789 = vsel %vm788, %v781, %v785
      %v790 = vand.u32 2147483647, %v679
      %vm791 = vcmp.eq.f32.partialorder %v790, 8.507059e+37
      %v792 = vand.u32 %v679, 2147483648
      %v793 = vor.u32 1.1754944e-38, %v792
      %v794 = vsel %vm791, %v793, %v789
      %v795 = vmul.f32 1.0, %v794
      %v796 = vrcp.pop %v680
      %v797 = vmul.f32 %v680, %v796
      %v798 = vsub.f32 1.0, %v797
      %v799 = vmul.f32 %v796, %v798
      %v800 = vadd.f32 %v796, %v799
      %vm801 = vweird.f32 %v680
      %vm802 = vweird.f32 %v796
      %vm803 = vmor %vm801, %vm802
      %v804 = vsel %vm803, %v796, %v800
      %v805 = vand.u32 2147483647, %v680
      %vm806 = vcmp.eq.f32.partialorder %v805, 8.507059e+37
      %v807 = vand.u32 %v680, 2147483648
      %v808 = vor.u32 1.1754944e-38, %v807
      %v809 = vsel %vm806, %v808, %v804
      %v810 = vmul.f32 1.0, %v809
      %v811 = vrcp.pop %v681
      %v812 = vmul.f32 %v681, %v811
      %v813 = vsub.f32 1.0, %v812
      %v814 = vmul.f32 %v811, %v813
      %v815 = vadd.f32 %v811, %v814
      %vm816 = vweird.f32 %v681
      %vm817 = vweird.f32 %v811
      %vm818 = vmor %vm816, %vm817
      %v819 = vsel %vm818, %v811, %v815
      %v820 = vand.u32 2147483647, %v681
      %vm821 = vcmp.eq.f32.partialorder %v820, 8.507059e+37
      %v822 = vand.u32 %v681, 2147483648
      %v823 = vor.u32 1.1754944e-38, %v822
      %v824 = vsel %vm821, %v823, %v819
      %v825 = vmul.f32 1.0, %v824
      %v826 = vrcp.pop %v682
      %v827 = vmul.f32 %v682, %v826
      %v828 = vsub.f32 1.0, %v827
      %v829 = vmul.f32 %v826, %v828
      %v830 = vadd.f32 %v826, %v829
      %vm831 = vweird.f32 %v682
      %vm832 = vweird.f32 %v826
      %vm833 = vmor %vm831, %vm832
      %v834 = vsel %vm833, %v826, %v830
      %v835 = vand.u32 2147483647, %v682
      %vm836 = vcmp.eq.f32.partialorder %v835, 8.507059e+37
      %v837 = vand.u32 %v682, 2147483648
      %v838 = vor.u32 1.1754944e-38, %v837
      %v839 = vsel %vm836, %v838, %v834
      %v840 = vmul.f32 1.0, %v839
      %v841 = vrcp.pop %v683
      %v842 = vmul.f32 %v683, %v841
      %v843 = vsub.f32 1.0, %v842
      %v844 = vmul.f32 %v841, %v843
      %v845 = vadd.f32 %v841, %v844
      %vm846 = vweird.f32 %v683
      %vm847 = vweird.f32 %v841
      %vm848 = vmor %vm846, %vm847
      %v849 = vsel %vm848, %v841, %v845
      %v850 = vand.u32 2147483647, %v683
      %vm851 = vcmp.eq.f32.partialorder %v850, 8.507059e+37
      %v852 = vand.u32 %v683, 2147483648
      %v853 = vor.u32 1.1754944e-38, %v852
      %v854 = vsel %vm851, %v853, %v849
      %v855 = vmul.f32 1.0, %v854
      %v856 = vrcp.pop %v684
      %v857 = vmul.f32 %v684, %v856
      %v858 = vsub.f32 1.0, %v857
      %v859 = vmul.f32 %v856, %v858
      %v860 = vadd.f32 %v856, %v859
      %vm861 = vweird.f32 %v684
      %vm862 = vweird.f32 %v856
      %vm863 = vmor %vm861, %vm862
      %v864 = vsel %vm863, %v856, %v860
      %v865 = vand.u32 2147483647, %v684
      %vm866 = vcmp.eq.f32.partialorder %v865, 8.507059e+37
      %v867 = vand.u32 %v684, 2147483648
      %v868 = vor.u32 1.1754944e-38, %v867
      %v869 = vsel %vm866, %v868, %v864
      %v870 = vmul.f32 1.0, %v869
      %v871 = vrcp.pop %v685
      %v872 = vmul.f32 %v685, %v871
      %v873 = vsub.f32 1.0, %v872
      %v874 = vmul.f32 %v871, %v873
      %v875 = vadd.f32 %v871, %v874
      %vm876 = vweird.f32 %v685
      %vm877 = vweird.f32 %v871
      %vm878 = vmor %vm876, %vm877
      %v879 = vsel %vm878, %v871, %v875
      %v880 = vand.u32 2147483647, %v685
      %vm881 = vcmp.eq.f32.partialorder %v880, 8.507059e+37
      %v882 = vand.u32 %v685, 2147483648
      %v883 = vor.u32 1.1754944e-38, %v882
      %v884 = vsel %vm881, %v883, %v879
      %v885 = vmul.f32 1.0, %v884
      %v886 = vrcp.pop %v686
      %v887 = vmul.f32 %v686, %v886
      %v888 = vsub.f32 1.0, %v887
      %v889 = vmul.f32 %v886, %v888
      %v890 = vadd.f32 %v886, %v889
      %vm891 = vweird.f32 %v686
      %vm892 = vweird.f32 %v886
      %vm893 = vmor %vm891, %vm892
      %v894 = vsel %vm893, %v886, %v890
      %v895 = vand.u32 2147483647, %v686
      %vm896 = vcmp.eq.f32.partialorder %v895, 8.507059e+37
      %v897 = vand.u32 %v686, 2147483648
      %v898 = vor.u32 1.1754944e-38, %v897
      %v899 = vsel %vm896, %v898, %v894
      %v900 = vmul.f32 1.0, %v899
      %v901 = vrcp.pop %v687
      %v902 = vmul.f32 %v687, %v901
      %v903 = vsub.f32 1.0, %v902
      %v904 = vmul.f32 %v901, %v903
      %v905 = vadd.f32 %v901, %v904
      %vm906 = vweird.f32 %v687
      %vm907 = vweird.f32 %v901
      %vm908 = vmor %vm906, %vm907
      %v909 = vsel %vm908, %v901, %v905
      %v910 = vand.u32 2147483647, %v687
      %vm911 = vcmp.eq.f32.partialorder %v910, 8.507059e+37
      %v912 = vand.u32 %v687, 2147483648
      %v913 = vor.u32 1.1754944e-38, %v912
      %v914 = vsel %vm911, %v913, %v909
      %v915 = vmul.f32 1.0, %v914
      %v916 = vrcp.pop %v688
      %v917 = vmul.f32 %v688, %v916
      %v918 = vsub.f32 1.0, %v917
      %v919 = vmul.f32 %v916, %v918
      %v920 = vadd.f32 %v916, %v919
      %vm921 = vweird.f32 %v688
      %vm922 = vweird.f32 %v916
      %vm923 = vmor %vm921, %vm922
      %v924 = vsel %vm923, %v916, %v920
      %v925 = vand.u32 2147483647, %v688
      %vm926 = vcmp.eq.f32.partialorder %v925, 8.507059e+37
      %v927 = vand.u32 %v688, 2147483648
      %v928 = vor.u32 1.1754944e-38, %v927
      %v929 = vsel %vm926, %v928, %v924
      %v930 = vmul.f32 1.0, %v929
      %v931 = vrcp.pop %v689
      %v932 = vmul.f32 %v689, %v931
      %v933 = vsub.f32 1.0, %v932
      %v934 = vmul.f32 %v931, %v933
      %v935 = vadd.f32 %v931, %v934
      %vm936 = vweird.f32 %v689
      %vm937 = vweird.f32 %v931
      %vm938 = vmor %vm936, %vm937
      %v939 = vsel %vm938, %v931, %v935
      %v940 = vand.u32 2147483647, %v689
      %vm941 = vcmp.eq.f32.partialorder %v940, 8.507059e+37
      %v942 = vand.u32 %v689, 2147483648
      %v943 = vor.u32 1.1754944e-38, %v942
      %v944 = vsel %vm941, %v943, %v939
      %v945 = vmul.f32 1.0, %v944
      %v946 = vrcp.pop %v690
      %v947 = vmul.f32 %v690, %v946
      %v948 = vsub.f32 1.0, %v947
      %v949 = vmul.f32 %v946, %v948
      %v950 = vadd.f32 %v946, %v949
      %vm951 = vweird.f32 %v690
      %vm952 = vweird.f32 %v946
      %vm953 = vmor %vm951, %vm952
      %v954 = vsel %vm953, %v946, %v950
      %v955 = vand.u32 2147483647, %v690
      %vm956 = vcmp.eq.f32.partialorder %v955, 8.507059e+37
      %v957 = vand.u32 %v690, 2147483648
      %v958 = vor.u32 1.1754944e-38, %v957
      %v959 = vsel %vm956, %v958, %v954
      %v960 = vmul.f32 1.0, %v959
      %v961 = vrcp.pop %v691
      %v962 = vmul.f32 %v691, %v961
      %v963 = vsub.f32 1.0, %v962
      %v964 = vmul.f32 %v961, %v963
      %v965 = vadd.f32 %v961, %v964
      %vm966 = vweird.f32 %v691
      %vm967 = vweird.f32 %v961
      %vm968 = vmor %vm966, %vm967
      %v969 = vsel %vm968, %v961, %v965
      %v970 = vand.u32 2147483647, %v691
      %vm971 = vcmp.eq.f32.partialorder %v970, 8.507059e+37
      %v972 = vand.u32 %v691, 2147483648
      %v973 = vor.u32 1.1754944e-38, %v972
      %v974 = vsel %vm971, %v973, %v969
      %v975 = vmul.f32 1.0, %v974
      %v976 = vrcp.pop %v692
      %v977 = vmul.f32 %v692, %v976
      %v978 = vsub.f32 1.0, %v977
      %v979 = vmul.f32 %v976, %v978
      %v980 = vadd.f32 %v976, %v979
      %vm981 = vweird.f32 %v692
      %vm982 = vweird.f32 %v976
      %vm983 = vmor %vm981, %vm982
      %v984 = vsel %vm983, %v976, %v980
      %v985 = vand.u32 2147483647, %v692
      %vm986 = vcmp.eq.f32.partialorder %v985, 8.507059e+37
      %v987 = vand.u32 %v692, 2147483648
      %v988 = vor.u32 1.1754944e-38, %v987
      %v989 = vsel %vm986, %v988, %v984
      %v990 = vmul.f32 1.0, %v989
      %v991 = vrcp.pop %v693
      %v992 = vmul.f32 %v693, %v991
      %v993 = vsub.f32 1.0, %v992
      %v994 = vmul.f32 %v991, %v993
      %v995 = vadd.f32 %v991, %v994
      %vm996 = vweird.f32 %v693
      %vm997 = vweird.f32 %v991
      %vm998 = vmor %vm996, %vm997
      %v999 = vsel %vm998, %v991, %v995
      %v1000 = vand.u32 2147483647, %v693
      %vm1001 = vcmp.eq.f32.partialorder %v1000, 8.507059e+37
      %v1002 = vand.u32 %v693, 2147483648
      %v1003 = vor.u32 1.1754944e-38, %v1002
      %v1004 = vsel %vm1001, %v1003, %v999
      %v1005 = vmul.f32 1.0, %v1004
      %v1006 = vrcp.pop %v694
      %v1007 = vmul.f32 %v694, %v1006
      %v1008 = vsub.f32 1.0, %v1007
      %v1009 = vmul.f32 %v1006, %v1008
      %v1010 = vadd.f32 %v1006, %v1009
      %vm1011 = vweird.f32 %v694
      %vm1012 = vweird.f32 %v1006
      %vm1013 = vmor %vm1011, %vm1012
      %v1014 = vsel %vm1013, %v1006, %v1010
      %v1015 = vand.u32 2147483647, %v694
      %vm1016 = vcmp.eq.f32.partialorder %v1015, 8.507059e+37
      %v1017 = vand.u32 %v694, 2147483648
      %v1018 = vor.u32 1.1754944e-38, %v1017
      %v1019 = vsel %vm1016, %v1018, %v1014
      %v1020 = vmul.f32 1.0, %v1019
      %v1021 = vrcp.pop %v695
      %v1022 = vmul.f32 %v695, %v1021
      %v1023 = vsub.f32 1.0, %v1022
      %v1024 = vmul.f32 %v1021, %v1023
      %v1025 = vadd.f32 %v1021, %v1024
      %vm1026 = vweird.f32 %v695
      %vm1027 = vweird.f32 %v1021
      %vm1028 = vmor %vm1026, %vm1027
      %v1029 = vsel %vm1028, %v1021, %v1025
      %v1030 = vand.u32 2147483647, %v695
      %vm1031 = vcmp.eq.f32.partialorder %v1030, 8.507059e+37
      %v1032 = vand.u32 %v695, 2147483648
      %v1033 = vor.u32 1.1754944e-38, %v1032
      %v1034 = vsel %vm1031, %v1033, %v1029
      %v1035 = vmul.f32 1.0, %v1034
      %v1036 = vrcp.pop %v696
      %v1037 = vmul.f32 %v696, %v1036
      %v1038 = vsub.f32 1.0, %v1037
      %v1039 = vmul.f32 %v1036, %v1038
      %v1040 = vadd.f32 %v1036, %v1039
      %vm1041 = vweird.f32 %v696
      %vm1042 = vweird.f32 %v1036
      %vm1043 = vmor %vm1041, %vm1042
      %v1044 = vsel %vm1043, %v1036, %v1040
      %v1045 = vand.u32 2147483647, %v696
      %vm1046 = vcmp.eq.f32.partialorder %v1045, 8.507059e+37
      %v1047 = vand.u32 %v696, 2147483648
      %v1048 = vor.u32 1.1754944e-38, %v1047
      %v1049 = vsel %vm1046, %v1048, %v1044
      %v1050 = vmul.f32 1.0, %v1049
      %v1051 = vrcp.pop %v697
      %v1052 = vmul.f32 %v697, %v1051
      %v1053 = vsub.f32 1.0, %v1052
      %v1054 = vmul.f32 %v1051, %v1053
      %v1055 = vadd.f32 %v1051, %v1054
      %vm1056 = vweird.f32 %v697
      %vm1057 = vweird.f32 %v1051
      %vm1058 = vmor %vm1056, %vm1057
      %v1059 = vsel %vm1058, %v1051, %v1055
      %v1060 = vand.u32 2147483647, %v697
      %vm1061 = vcmp.eq.f32.partialorder %v1060, 8.507059e+37
      %v1062 = vand.u32 %v697, 2147483648
      %v1063 = vor.u32 1.1754944e-38, %v1062
      %v1064 = vsel %vm1061, %v1063, %v1059
      %v1065 = vmul.f32 1.0, %v1064
      %v1066 = vrcp.pop %v698
      %v1067 = vmul.f32 %v698, %v1066
      %v1068 = vsub.f32 1.0, %v1067
      %v1069 = vmul.f32 %v1066, %v1068
      %v1070 = vadd.f32 %v1066, %v1069
      %vm1071 = vweird.f32 %v698
      %vm1072 = vweird.f32 %v1066
      %vm1073 = vmor %vm1071, %vm1072
      %v1074 = vsel %vm1073, %v1066, %v1070
      %v1075 = vand.u32 2147483647, %v698
      %vm1076 = vcmp.eq.f32.partialorder %v1075, 8.507059e+37
      %v1077 = vand.u32 %v698, 2147483648
      %v1078 = vor.u32 1.1754944e-38, %v1077
      %v1079 = vsel %vm1076, %v1078, %v1074
      %v1080 = vmul.f32 1.0, %v1079
      %v1081 = vrcp.pop %v699
      %v1082 = vmul.f32 %v699, %v1081
      %v1083 = vsub.f32 1.0, %v1082
      %v1084 = vmul.f32 %v1081, %v1083
      %v1085 = vadd.f32 %v1081, %v1084
      %vm1086 = vweird.f32 %v699
      %vm1087 = vweird.f32 %v1081
      %vm1088 = vmor %vm1086, %vm1087
      %v1089 = vsel %vm1088, %v1081, %v1085
      %v1090 = vand.u32 2147483647, %v699
      %vm1091 = vcmp.eq.f32.partialorder %v1090, 8.507059e+37
      %v1092 = vand.u32 %v699, 2147483648
      %v1093 = vor.u32 1.1754944e-38, %v1092
      %v1094 = vsel %vm1091, %v1093, %v1089
      %v1095 = vmul.f32 1.0, %v1094
      %v1096 = vrcp.pop %v700
      %v1097 = vmul.f32 %v700, %v1096
      %v1098 = vsub.f32 1.0, %v1097
      %v1099 = vmul.f32 %v1096, %v1098
      %v1100 = vadd.f32 %v1096, %v1099
      %vm1101 = vweird.f32 %v700
      %vm1102 = vweird.f32 %v1096
      %vm1103 = vmor %vm1101, %vm1102
      %v1104 = vsel %vm1103, %v1096, %v1100
      %v1105 = vand.u32 2147483647, %v700
      %vm1106 = vcmp.eq.f32.partialorder %v1105, 8.507059e+37
      %v1107 = vand.u32 %v700, 2147483648
      %v1108 = vor.u32 1.1754944e-38, %v1107
      %v1109 = vsel %vm1106, %v1108, %v1104
      %v1110 = vmul.f32 1.0, %v1109
      %v1111 = vrcp.pop %v701
      %v1112 = vmul.f32 %v701, %v1111
      %v1113 = vsub.f32 1.0, %v1112
      %v1114 = vmul.f32 %v1111, %v1113
      %v1115 = vadd.f32 %v1111, %v1114
      %vm1116 = vweird.f32 %v701
      %vm1117 = vweird.f32 %v1111
      %vm1118 = vmor %vm1116, %vm1117
      %v1119 = vsel %vm1118, %v1111, %v1115
      %v1120 = vand.u32 2147483647, %v701
      %vm1121 = vcmp.eq.f32.partialorder %v1120, 8.507059e+37
      %v1122 = vand.u32 %v701, 2147483648
      %v1123 = vor.u32 1.1754944e-38, %v1122
      %v1124 = vsel %vm1121, %v1123, %v1119
      %v1125 = vmul.f32 1.0, %v1124
      %v1126 = vrcp.pop %v702
      %v1127 = vmul.f32 %v702, %v1126
      %v1128 = vsub.f32 1.0, %v1127
      %v1129 = vmul.f32 %v1126, %v1128
      %v1130 = vadd.f32 %v1126, %v1129
      %vm1131 = vweird.f32 %v702
      %vm1132 = vweird.f32 %v1126
      %vm1133 = vmor %vm1131, %vm1132
      %v1134 = vsel %vm1133, %v1126, %v1130
      %v1135 = vand.u32 2147483647, %v702
      %vm1136 = vcmp.eq.f32.partialorder %v1135, 8.507059e+37
      %v1137 = vand.u32 %v702, 2147483648
      %v1138 = vor.u32 1.1754944e-38, %v1137
      %v1139 = vsel %vm1136, %v1138, %v1134
      %v1140 = vmul.f32 1.0, %v1139
      %v1141 = vrcp.pop %v703
      %v1142 = vmul.f32 %v703, %v1141
      %v1143 = vsub.f32 1.0, %v1142
      %v1144 = vmul.f32 %v1141, %v1143
      %v1145 = vadd.f32 %v1141, %v1144
      %vm1146 = vweird.f32 %v703
      %vm1147 = vweird.f32 %v1141
      %vm1148 = vmor %vm1146, %vm1147
      %v1149 = vsel %vm1148, %v1141, %v1145
      %v1150 = vand.u32 2147483647, %v703
      %vm1151 = vcmp.eq.f32.partialorder %v1150, 8.507059e+37
      %v1152 = vand.u32 %v703, 2147483648
      %v1153 = vor.u32 1.1754944e-38, %v1152
      %v1154 = vsel %vm1151, %v1153, %v1149
      %v1155 = vmul.f32 1.0, %v1154
      %v1156 = vrcp.pop %v704
      %v1157 = vmul.f32 %v704, %v1156
      %v1158 = vsub.f32 1.0, %v1157
      %v1159 = vmul.f32 %v1156, %v1158
      %v1160 = vadd.f32 %v1156, %v1159
      %vm1161 = vweird.f32 %v704
      %vm1162 = vweird.f32 %v1156
      %vm1163 = vmor %vm1161, %vm1162
      %v1164 = vsel %vm1163, %v1156, %v1160
      %v1165 = vand.u32 2147483647, %v704
      %vm1166 = vcmp.eq.f32.partialorder %v1165, 8.507059e+37
      %v1167 = vand.u32 %v704, 2147483648
      %v1168 = vor.u32 1.1754944e-38, %v1167
      %v1169 = vsel %vm1166, %v1168, %v1164
      %v1170 = vmul.f32 1.0, %v1169
      %v1171 = vrcp.pop %v705
      %v1172 = vmul.f32 %v705, %v1171
      %v1173 = vsub.f32 1.0, %v1172
      %v1174 = vmul.f32 %v1171, %v1173
      %v1175 = vadd.f32 %v1171, %v1174
      %vm1176 = vweird.f32 %v705
      %vm1177 = vweird.f32 %v1171
      %vm1178 = vmor %vm1176, %vm1177
      %v1179 = vsel %vm1178, %v1171, %v1175
      %v1180 = vand.u32 2147483647, %v705
      %vm1181 = vcmp.eq.f32.partialorder %v1180, 8.507059e+37
      %v1182 = vand.u32 %v705, 2147483648
      %v1183 = vor.u32 1.1754944e-38, %v1182
      %v1184 = vsel %vm1181, %v1183, %v1179
      %v1185 = vmul.f32 1.0, %v1184
      %v1186 = vtanh.pop %v499
      %v1187 = vtanh.pop %v501
      %v1188 = vtanh.pop %v504
      %v1189 = vtanh.pop %v506
      %v1190 = vtanh.pop %v509
      %v1191 = vtanh.pop %v511
      %v1192 = vtanh.pop %v514
      %v1193 = vtanh.pop %v516
      %v1194 = vtanh.pop %v519
      %v1195 = vtanh.pop %v521
      %v1196 = vtanh.pop %v524
      %v1197 = vtanh.pop %v526
      %v1198 = vtanh.pop %v529
      %v1199 = vtanh.pop %v531
      %v1200 = vtanh.pop %v534
      %v1201 = vtanh.pop %v536
      %v1202 = vtanh.pop %v539
      %v1203 = vtanh.pop %v541
      %v1204 = vtanh.pop %v544
      %v1205 = vtanh.pop %v546
      %v1206 = vtanh.pop %v549
      %v1207 = vtanh.pop %v551
      %v1208 = vtanh.pop %v554
      %v1209 = vtanh.pop %v556
      %v1210 = vtanh.pop %v559
      %v1211 = vtanh.pop %v561
      %v1212 = vtanh.pop %v564
      %v1213 = vtanh.pop %v566
      %v1214 = vtanh.pop %v569
      %v1215 = vtanh.pop %v571
      %v1216 = vtanh.pop %v574
      %v1217 = vtanh.pop %v576
      %v1218 = vld [vmem:[%s250] sm:$0xff]
      %v1219 = vld [vmem:[%s250 + $0x8] sm:$0xff]
      %v1220 = vld [vmem:[%s250 + $0x10] sm:$0xff]
      %v1221 = vld [vmem:[%s250 + $0x18] sm:$0xff]
      %v1222 = vld [vmem:[%s250 + $0x20] sm:$0xff]
      %v1223 = vld [vmem:[%s250 + $0x28] sm:$0xff]
      %v1224 = vld [vmem:[%s250 + $0x30] sm:$0xff]
      %v1225 = vld [vmem:[%s250 + $0x38] sm:$0xff]
      %v1226 = vld [vmem:[%s250 + $0x40] sm:$0xff]
      %v1227 = vld [vmem:[%s250 + $0x48] sm:$0xff]
      %v1228 = vld [vmem:[%s250 + $0x50] sm:$0xff]
      %v1229 = vld [vmem:[%s250 + $0x58] sm:$0xff]
      %v1230 = vld [vmem:[%s250 + $0x60] sm:$0xff]
      %v1231 = vld [vmem:[%s250 + $0x68] sm:$0xff]
      %v1232 = vld [vmem:[%s250 + $0x70] sm:$0xff]
      %v1233 = vld [vmem:[%s250 + $0x78] sm:$0xff]
      %v1234 = vld [vmem:[%s250 + $0x80] sm:$0xff]
      %v1235 = vld [vmem:[%s250 + $0x88] sm:$0xff]
      %v1236 = vld [vmem:[%s250 + $0x90] sm:$0xff]
      %v1237 = vld [vmem:[%s250 + $0x98] sm:$0xff]
      %v1238 = vld [vmem:[%s250 + $0xa0] sm:$0xff]
      %v1239 = vld [vmem:[%s250 + $0xa8] sm:$0xff]
      %v1240 = vld [vmem:[%s250 + $0xb0] sm:$0xff]
      %v1241 = vld [vmem:[%s250 + $0xb8] sm:$0xff]
      %v1242 = vld [vmem:[%s250 + $0xc0] sm:$0xff]
      %v1243 = vld [vmem:[%s250 + $0xc8] sm:$0xff]
      %v1244 = vld [vmem:[%s250 + $0xd0] sm:$0xff]
      %v1245 = vld [vmem:[%s250 + $0xd8] sm:$0xff]
      %v1246 = vld [vmem:[%s250 + $0xe0] sm:$0xff]
      %v1247 = vld [vmem:[%s250 + $0xe8] sm:$0xff]
      %v1248 = vld [vmem:[%s250 + $0xf0] sm:$0xff]
      %v1249 = vld [vmem:[%s250 + $0xf8] sm:$0xff]
      %1282 = vrot.lane.b32.xlu0 %v1218, 8
      %v1283 = vpop.permute.xlu0 %1282
      %1284 = vrot.lane.b32.xlu0 %v1219, 8
      %v1285 = vpop.permute.xlu0 %1284
      %1286 = vrot.lane.b32.xlu0 %v1220, 8
      %v1287 = vpop.permute.xlu0 %1286
      %1288 = vrot.lane.b32.xlu0 %v1221, 8
      %v1289 = vpop.permute.xlu0 %1288
      %1290 = vrot.lane.b32.xlu0 %v1222, 8
      %v1291 = vpop.permute.xlu0 %1290
      %1292 = vrot.lane.b32.xlu0 %v1223, 8
      %v1293 = vpop.permute.xlu0 %1292
      %1294 = vrot.lane.b32.xlu0 %v1224, 8
      %v1295 = vpop.permute.xlu0 %1294
      %1296 = vrot.lane.b32.xlu0 %v1225, 8
      %v1297 = vpop.permute.xlu0 %1296
      %1298 = vrot.lane.b32.xlu0 %v1226, 8
      %v1299 = vpop.permute.xlu0 %1298
      %1300 = vrot.lane.b32.xlu0 %v1227, 8
      %v1301 = vpop.permute.xlu0 %1300
      %1302 = vrot.lane.b32.xlu0 %v1228, 8
      %v1303 = vpop.permute.xlu0 %1302
      %1304 = vrot.lane.b32.xlu0 %v1229, 8
      %v1305 = vpop.permute.xlu0 %1304
      %1306 = vrot.lane.b32.xlu0 %v1230, 8
      %v1307 = vpop.permute.xlu0 %1306
      %1308 = vrot.lane.b32.xlu0 %v1231, 8
      %v1309 = vpop.permute.xlu0 %1308
      %1310 = vrot.lane.b32.xlu0 %v1232, 8
      %v1311 = vpop.permute.xlu0 %1310
      %1312 = vrot.lane.b32.xlu0 %v1233, 8
      %v1313 = vpop.permute.xlu0 %1312
      %1314 = vrot.lane.b32.xlu0 %v1234, 8
      %v1315 = vpop.permute.xlu0 %1314
      %1316 = vrot.lane.b32.xlu0 %v1235, 8
      %v1317 = vpop.permute.xlu0 %1316
      %1318 = vrot.lane.b32.xlu0 %v1236, 8
      %v1319 = vpop.permute.xlu0 %1318
      %1320 = vrot.lane.b32.xlu0 %v1237, 8
      %v1321 = vpop.permute.xlu0 %1320
      %1322 = vrot.lane.b32.xlu0 %v1238, 8
      %v1323 = vpop.permute.xlu0 %1322
      %1324 = vrot.lane.b32.xlu0 %v1239, 8
      %v1325 = vpop.permute.xlu0 %1324
      %1326 = vrot.lane.b32.xlu0 %v1240, 8
      %v1327 = vpop.permute.xlu0 %1326
      %1328 = vrot.lane.b32.xlu0 %v1241, 8
      %v1329 = vpop.permute.xlu0 %1328
      %1330 = vrot.lane.b32.xlu0 %v1242, 8
      %v1331 = vpop.permute.xlu0 %1330
      %1332 = vrot.lane.b32.xlu0 %v1243, 8
      %v1333 = vpop.permute.xlu0 %1332
      %1334 = vrot.lane.b32.xlu0 %v1244, 8
      %v1335 = vpop.permute.xlu0 %1334
      %1336 = vrot.lane.b32.xlu0 %v1245, 8
      %v1337 = vpop.permute.xlu0 %1336
      %1338 = vrot.lane.b32.xlu0 %v1246, 8
      %v1339 = vpop.permute.xlu0 %1338
      %1340 = vrot.lane.b32.xlu0 %v1247, 8
      %v1341 = vpop.permute.xlu0 %1340
      %1342 = vrot.lane.b32.xlu0 %v1248, 8
      %v1343 = vpop.permute.xlu0 %1342
      %1344 = vrot.lane.b32.xlu0 %v1249, 8
      %v1345 = vpop.permute.xlu0 %1344
      %v1378 = vmul.f32 %v720, %v1283
      %v1379 = vmul.f32 %v735, %v1285
      %v1380 = vmul.f32 %v750, %v1287
      %v1381 = vmul.f32 %v765, %v1289
      %v1382 = vmul.f32 %v780, %v1291
      %v1383 = vmul.f32 %v795, %v1293
      %v1384 = vmul.f32 %v810, %v1295
      %v1385 = vmul.f32 %v825, %v1297
      %v1386 = vmul.f32 %v840, %v1299
      %v1387 = vmul.f32 %v855, %v1301
      %v1388 = vmul.f32 %v870, %v1303
      %v1389 = vmul.f32 %v885, %v1305
      %v1390 = vmul.f32 %v900, %v1307
      %v1391 = vmul.f32 %v915, %v1309
      %v1392 = vmul.f32 %v930, %v1311
      %v1393 = vmul.f32 %v945, %v1313
      %v1394 = vmul.f32 %v960, %v1315
      %v1395 = vmul.f32 %v975, %v1317
      %v1396 = vmul.f32 %v990, %v1319
      %v1397 = vmul.f32 %v1005, %v1321
      %v1398 = vmul.f32 %v1020, %v1323
      %v1399 = vmul.f32 %v1035, %v1325
      %v1400 = vmul.f32 %v1050, %v1327
      %v1401 = vmul.f32 %v1065, %v1329
      %v1402 = vmul.f32 %v1080, %v1331
      %v1403 = vmul.f32 %v1095, %v1333
      %v1404 = vmul.f32 %v1110, %v1335
      %v1405 = vmul.f32 %v1125, %v1337
      %v1406 = vmul.f32 %v1140, %v1339
      %v1407 = vmul.f32 %v1155, %v1341
      %v1408 = vmul.f32 %v1170, %v1343
      %v1409 = vmul.f32 %v1185, %v1345
      %1442 = vrot.lane.b32.xlu0 %v1186, 104
      %v1443 = vpop.permute.xlu0 %1442
      %1444 = vrot.lane.b32.xlu0 %v1187, 104
      %v1445 = vpop.permute.xlu0 %1444
      %1446 = vrot.lane.b32.xlu0 %v1188, 104
      %v1447 = vpop.permute.xlu0 %1446
      %1448 = vrot.lane.b32.xlu0 %v1189, 104
      %v1449 = vpop.permute.xlu0 %1448
      %1450 = vrot.lane.b32.xlu0 %v1190, 104
      %v1451 = vpop.permute.xlu0 %1450
      %1452 = vrot.lane.b32.xlu0 %v1191, 104
      %v1453 = vpop.permute.xlu0 %1452
      %1454 = vrot.lane.b32.xlu0 %v1192, 104
      %v1455 = vpop.permute.xlu0 %1454
      %1456 = vrot.lane.b32.xlu0 %v1193, 104
      %v1457 = vpop.permute.xlu0 %1456
      %1458 = vrot.lane.b32.xlu0 %v1194, 104
      %v1459 = vpop.permute.xlu0 %1458
      %1460 = vrot.lane.b32.xlu0 %v1195, 104
      %v1461 = vpop.permute.xlu0 %1460
      %1462 = vrot.lane.b32.xlu0 %v1196, 104
      %v1463 = vpop.permute.xlu0 %1462
      %1464 = vrot.lane.b32.xlu0 %v1197, 104
      %v1465 = vpop.permute.xlu0 %1464
      %1466 = vrot.lane.b32.xlu0 %v1198, 104
      %v1467 = vpop.permute.xlu0 %1466
      %1468 = vrot.lane.b32.xlu0 %v1199, 104
      %v1469 = vpop.permute.xlu0 %1468
      %1470 = vrot.lane.b32.xlu0 %v1200, 104
      %v1471 = vpop.permute.xlu0 %1470
      %1472 = vrot.lane.b32.xlu0 %v1201, 104
      %v1473 = vpop.permute.xlu0 %1472
      %1474 = vrot.lane.b32.xlu0 %v1202, 104
      %v1475 = vpop.permute.xlu0 %1474
      %1476 = vrot.lane.b32.xlu0 %v1203, 104
      %v1477 = vpop.permute.xlu0 %1476
      %1478 = vrot.lane.b32.xlu0 %v1204, 104
      %v1479 = vpop.permute.xlu0 %1478
      %1480 = vrot.lane.b32.xlu0 %v1205, 104
      %v1481 = vpop.permute.xlu0 %1480
      %1482 = vrot.lane.b32.xlu0 %v1206, 104
      %v1483 = vpop.permute.xlu0 %1482
      %1484 = vrot.lane.b32.xlu0 %v1207, 104
      %v1485 = vpop.permute.xlu0 %1484
      %1486 = vrot.lane.b32.xlu0 %v1208, 104
      %v1487 = vpop.permute.xlu0 %1486
      %1488 = vrot.lane.b32.xlu0 %v1209, 104
      %v1489 = vpop.permute.xlu0 %1488
      %1490 = vrot.lane.b32.xlu0 %v1210, 104
      %v1491 = vpop.permute.xlu0 %1490
      %1492 = vrot.lane.b32.xlu0 %v1211, 104
      %v1493 = vpop.permute.xlu0 %1492
      %1494 = vrot.lane.b32.xlu0 %v1212, 104
      %v1495 = vpop.permute.xlu0 %1494
      %1496 = vrot.lane.b32.xlu0 %v1213, 104
      %v1497 = vpop.permute.xlu0 %1496
      %1498 = vrot.lane.b32.xlu0 %v1214, 104
      %v1499 = vpop.permute.xlu0 %1498
      %1500 = vrot.lane.b32.xlu0 %v1215, 104
      %v1501 = vpop.permute.xlu0 %1500
      %1502 = vrot.lane.b32.xlu0 %v1216, 104
      %v1503 = vpop.permute.xlu0 %1502
      %1504 = vrot.lane.b32.xlu0 %v1217, 104
      %v1505 = vpop.permute.xlu0 %1504
      %v1538 = vmul.f32 %v720, %v1443
      %v1539 = vmul.f32 %v735, %v1445
      %v1540 = vmul.f32 %v750, %v1447
      %v1541 = vmul.f32 %v765, %v1449
      %v1542 = vmul.f32 %v780, %v1451
      %v1543 = vmul.f32 %v795, %v1453
      %v1544 = vmul.f32 %v810, %v1455
      %v1545 = vmul.f32 %v825, %v1457
      %v1546 = vmul.f32 %v840, %v1459
      %v1547 = vmul.f32 %v855, %v1461
      %v1548 = vmul.f32 %v870, %v1463
      %v1549 = vmul.f32 %v885, %v1465
      %v1550 = vmul.f32 %v900, %v1467
      %v1551 = vmul.f32 %v915, %v1469
      %v1552 = vmul.f32 %v930, %v1471
      %v1553 = vmul.f32 %v945, %v1473
      %v1554 = vmul.f32 %v960, %v1475
      %v1555 = vmul.f32 %v975, %v1477
      %v1556 = vmul.f32 %v990, %v1479
      %v1557 = vmul.f32 %v1005, %v1481
      %v1558 = vmul.f32 %v1020, %v1483
      %v1559 = vmul.f32 %v1035, %v1485
      %v1560 = vmul.f32 %v1050, %v1487
      %v1561 = vmul.f32 %v1065, %v1489
      %v1562 = vmul.f32 %v1080, %v1491
      %v1563 = vmul.f32 %v1095, %v1493
      %v1564 = vmul.f32 %v1110, %v1495
      %v1565 = vmul.f32 %v1125, %v1497
      %v1566 = vmul.f32 %v1140, %v1499
      %v1567 = vmul.f32 %v1155, %v1501
      %v1568 = vmul.f32 %v1170, %v1503
      %v1569 = vmul.f32 %v1185, %v1505
      %1602 = vrot.lane.b32.xlu0 %v1538, 8
      %v1603 = vpop.permute.xlu0 %1602
      %1604 = vrot.lane.b32.xlu0 %v1539, 8
      %v1605 = vpop.permute.xlu0 %1604
      %1606 = vrot.lane.b32.xlu0 %v1540, 8
      %v1607 = vpop.permute.xlu0 %1606
      %1608 = vrot.lane.b32.xlu0 %v1541, 8
      %v1609 = vpop.permute.xlu0 %1608
      %1610 = vrot.lane.b32.xlu0 %v1542, 8
      %v1611 = vpop.permute.xlu0 %1610
      %1612 = vrot.lane.b32.xlu0 %v1543, 8
      %v1613 = vpop.permute.xlu0 %1612
      %1614 = vrot.lane.b32.xlu0 %v1544, 8
      %v1615 = vpop.permute.xlu0 %1614
      %1616 = vrot.lane.b32.xlu0 %v1545, 8
      %v1617 = vpop.permute.xlu0 %1616
      %1618 = vrot.lane.b32.xlu0 %v1546, 8
      %v1619 = vpop.permute.xlu0 %1618
      %1620 = vrot.lane.b32.xlu0 %v1547, 8
      %v1621 = vpop.permute.xlu0 %1620
      %1622 = vrot.lane.b32.xlu0 %v1548, 8
      %v1623 = vpop.permute.xlu0 %1622
      %1624 = vrot.lane.b32.xlu0 %v1549, 8
      %v1625 = vpop.permute.xlu0 %1624
      %1626 = vrot.lane.b32.xlu0 %v1550, 8
      %v1627 = vpop.permute.xlu0 %1626
      %1628 = vrot.lane.b32.xlu0 %v1551, 8
      %v1629 = vpop.permute.xlu0 %1628
      %1630 = vrot.lane.b32.xlu0 %v1552, 8
      %v1631 = vpop.permute.xlu0 %1630
      %1632 = vrot.lane.b32.xlu0 %v1553, 8
      %v1633 = vpop.permute.xlu0 %1632
      %1634 = vrot.lane.b32.xlu0 %v1554, 8
      %v1635 = vpop.permute.xlu0 %1634
      %1636 = vrot.lane.b32.xlu0 %v1555, 8
      %v1637 = vpop.permute.xlu0 %1636
      %1638 = vrot.lane.b32.xlu0 %v1556, 8
      %v1639 = vpop.permute.xlu0 %1638
      %1640 = vrot.lane.b32.xlu0 %v1557, 8
      %v1641 = vpop.permute.xlu0 %1640
      %1642 = vrot.lane.b32.xlu0 %v1558, 8
      %v1643 = vpop.permute.xlu0 %1642
      %1644 = vrot.lane.b32.xlu0 %v1559, 8
      %v1645 = vpop.permute.xlu0 %1644
      %1646 = vrot.lane.b32.xlu0 %v1560, 8
      %v1647 = vpop.permute.xlu0 %1646
      %1648 = vrot.lane.b32.xlu0 %v1561, 8
      %v1649 = vpop.permute.xlu0 %1648
      %1650 = vrot.lane.b32.xlu0 %v1562, 8
      %v1651 = vpop.permute.xlu0 %1650
      %1652 = vrot.lane.b32.xlu0 %v1563, 8
      %v1653 = vpop.permute.xlu0 %1652
      %1654 = vrot.lane.b32.xlu0 %v1564, 8
      %v1655 = vpop.permute.xlu0 %1654
      %1656 = vrot.lane.b32.xlu0 %v1565, 8
      %v1657 = vpop.permute.xlu0 %1656
      %1658 = vrot.lane.b32.xlu0 %v1566, 8
      %v1659 = vpop.permute.xlu0 %1658
      %1660 = vrot.lane.b32.xlu0 %v1567, 8
      %v1661 = vpop.permute.xlu0 %1660
      %1662 = vrot.lane.b32.xlu0 %v1568, 8
      %v1663 = vpop.permute.xlu0 %1662
      %1664 = vrot.lane.b32.xlu0 %v1569, 8
      %v1665 = vpop.permute.xlu0 %1664
      %v1698 = vadd.f32 %v1378, %v1603
      %v1699 = vadd.f32 %v1379, %v1605
      %v1700 = vadd.f32 %v1380, %v1607
      %v1701 = vadd.f32 %v1381, %v1609
      %v1702 = vadd.f32 %v1382, %v1611
      %v1703 = vadd.f32 %v1383, %v1613
      %v1704 = vadd.f32 %v1384, %v1615
      %v1705 = vadd.f32 %v1385, %v1617
      %v1706 = vadd.f32 %v1386, %v1619
      %v1707 = vadd.f32 %v1387, %v1621
      %v1708 = vadd.f32 %v1388, %v1623
      %v1709 = vadd.f32 %v1389, %v1625
      %v1710 = vadd.f32 %v1390, %v1627
      %v1711 = vadd.f32 %v1391, %v1629
      %v1712 = vadd.f32 %v1392, %v1631
      %v1713 = vadd.f32 %v1393, %v1633
      %v1714 = vadd.f32 %v1394, %v1635
      %v1715 = vadd.f32 %v1395, %v1637
      %v1716 = vadd.f32 %v1396, %v1639
      %v1717 = vadd.f32 %v1397, %v1641
      %v1718 = vadd.f32 %v1398, %v1643
      %v1719 = vadd.f32 %v1399, %v1645
      %v1720 = vadd.f32 %v1400, %v1647
      %v1721 = vadd.f32 %v1401, %v1649
      %v1722 = vadd.f32 %v1402, %v1651
      %v1723 = vadd.f32 %v1403, %v1653
      %v1724 = vadd.f32 %v1404, %v1655
      %v1725 = vadd.f32 %v1405, %v1657
      %v1726 = vadd.f32 %v1406, %v1659
      %v1727 = vadd.f32 %v1407, %v1661
      %v1728 = vadd.f32 %v1408, %v1663
      %v1729 = vadd.f32 %v1409, %v1665
      %1762 = vrot.lane.b32.xlu0 %v1698, 120
      %v1763 = vpop.permute.xlu0 %1762
      %1764 = vrot.lane.b32.xlu0 %v1699, 120
      %v1765 = vpop.permute.xlu0 %1764
      %1766 = vrot.lane.b32.xlu0 %v1700, 120
      %v1767 = vpop.permute.xlu0 %1766
      %1768 = vrot.lane.b32.xlu0 %v1701, 120
      %v1769 = vpop.permute.xlu0 %1768
      %1770 = vrot.lane.b32.xlu0 %v1702, 120
      %v1771 = vpop.permute.xlu0 %1770
      %1772 = vrot.lane.b32.xlu0 %v1703, 120
      %v1773 = vpop.permute.xlu0 %1772
      %1774 = vrot.lane.b32.xlu0 %v1704, 120
      %v1775 = vpop.permute.xlu0 %1774
      %1776 = vrot.lane.b32.xlu0 %v1705, 120
      %v1777 = vpop.permute.xlu0 %1776
      %1778 = vrot.lane.b32.xlu0 %v1706, 120
      %v1779 = vpop.permute.xlu0 %1778
      %1780 = vrot.lane.b32.xlu0 %v1707, 120
      %v1781 = vpop.permute.xlu0 %1780
      %1782 = vrot.lane.b32.xlu0 %v1708, 120
      %v1783 = vpop.permute.xlu0 %1782
      %1784 = vrot.lane.b32.xlu0 %v1709, 120
      %v1785 = vpop.permute.xlu0 %1784
      %1786 = vrot.lane.b32.xlu0 %v1710, 120
      %v1787 = vpop.permute.xlu0 %1786
      %1788 = vrot.lane.b32.xlu0 %v1711, 120
      %v1789 = vpop.permute.xlu0 %1788
      %1790 = vrot.lane.b32.xlu0 %v1712, 120
      %v1791 = vpop.permute.xlu0 %1790
      %1792 = vrot.lane.b32.xlu0 %v1713, 120
      %v1793 = vpop.permute.xlu0 %1792
      %1794 = vrot.lane.b32.xlu0 %v1714, 120
      %v1795 = vpop.permute.xlu0 %1794
      %1796 = vrot.lane.b32.xlu0 %v1715, 120
      %v1797 = vpop.permute.xlu0 %1796
      %1798 = vrot.lane.b32.xlu0 %v1716, 120
      %v1799 = vpop.permute.xlu0 %1798
      %1800 = vrot.lane.b32.xlu0 %v1717, 120
      %v1801 = vpop.permute.xlu0 %1800
      %1802 = vrot.lane.b32.xlu0 %v1718, 120
      %v1803 = vpop.permute.xlu0 %1802
      %1804 = vrot.lane.b32.xlu0 %v1719, 120
      %v1805 = vpop.permute.xlu0 %1804
      %1806 = vrot.lane.b32.xlu0 %v1720, 120
      %v1807 = vpop.permute.xlu0 %1806
      %1808 = vrot.lane.b32.xlu0 %v1721, 120
      %v1809 = vpop.permute.xlu0 %1808
      %1810 = vrot.lane.b32.xlu0 %v1722, 120
      %v1811 = vpop.permute.xlu0 %1810
      %1812 = vrot.lane.b32.xlu0 %v1723, 120
      %v1813 = vpop.permute.xlu0 %1812
      %1814 = vrot.lane.b32.xlu0 %v1724, 120
      %v1815 = vpop.permute.xlu0 %1814
      %1816 = vrot.lane.b32.xlu0 %v1725, 120
      %v1817 = vpop.permute.xlu0 %1816
      %1818 = vrot.lane.b32.xlu0 %v1726, 120
      %v1819 = vpop.permute.xlu0 %1818
      %1820 = vrot.lane.b32.xlu0 %v1727, 120
      %v1821 = vpop.permute.xlu0 %1820
      %1822 = vrot.lane.b32.xlu0 %v1728, 120
      %v1823 = vpop.permute.xlu0 %1822
      %1824 = vrot.lane.b32.xlu0 %v1729, 120
      %v1825 = vpop.permute.xlu0 %1824
      %vm1858 = vcmask 64512
      %1859 = vst.msk [vmem:[%s262] sm:$0xff] %vm1858, %v1763
      %1860 = vst.msk [vmem:[%s262 + $0x8] sm:$0xff] %vm1858, %v1765
      %1861 = vst.msk [vmem:[%s262 + $0x10] sm:$0xff] %vm1858, %v1767
      %1862 = vst.msk [vmem:[%s262 + $0x18] sm:$0xff] %vm1858, %v1769
      %1863 = vst.msk [vmem:[%s262 + $0x20] sm:$0xff] %vm1858, %v1771
      %1864 = vst.msk [vmem:[%s262 + $0x28] sm:$0xff] %vm1858, %v1773
      %1865 = vst.msk [vmem:[%s262 + $0x30] sm:$0xff] %vm1858, %v1775
      %1866 = vst.msk [vmem:[%s262 + $0x38] sm:$0xff] %vm1858, %v1777
      %1867 = vst.msk [vmem:[%s262 + $0x40] sm:$0xff] %vm1858, %v1779
      %1868 = vst.msk [vmem:[%s262 + $0x48] sm:$0xff] %vm1858, %v1781
      %1869 = vst.msk [vmem:[%s262 + $0x50] sm:$0xff] %vm1858, %v1783
      %1870 = vst.msk [vmem:[%s262 + $0x58] sm:$0xff] %vm1858, %v1785
      %1871 = vst.msk [vmem:[%s262 + $0x60] sm:$0xff] %vm1858, %v1787
      %1872 = vst.msk [vmem:[%s262 + $0x68] sm:$0xff] %vm1858, %v1789
      %1873 = vst.msk [vmem:[%s262 + $0x70] sm:$0xff] %vm1858, %v1791
      %1874 = vst.msk [vmem:[%s262 + $0x78] sm:$0xff] %vm1858, %v1793
      %1875 = vst.msk [vmem:[%s262 + $0x80] sm:$0xff] %vm1858, %v1795
      %1876 = vst.msk [vmem:[%s262 + $0x88] sm:$0xff] %vm1858, %v1797
      %1877 = vst.msk [vmem:[%s262 + $0x90] sm:$0xff] %vm1858, %v1799
      %1878 = vst.msk [vmem:[%s262 + $0x98] sm:$0xff] %vm1858, %v1801
      %1879 = vst.msk [vmem:[%s262 + $0xa0] sm:$0xff] %vm1858, %v1803
      %1880 = vst.msk [vmem:[%s262 + $0xa8] sm:$0xff] %vm1858, %v1805
      %1881 = vst.msk [vmem:[%s262 + $0xb0] sm:$0xff] %vm1858, %v1807
      %1882 = vst.msk [vmem:[%s262 + $0xb8] sm:$0xff] %vm1858, %v1809
      %1883 = vst.msk [vmem:[%s262 + $0xc0] sm:$0xff] %vm1858, %v1811
      %1884 = vst.msk [vmem:[%s262 + $0xc8] sm:$0xff] %vm1858, %v1813
      %1885 = vst.msk [vmem:[%s262 + $0xd0] sm:$0xff] %vm1858, %v1815
      %1886 = vst.msk [vmem:[%s262 + $0xd8] sm:$0xff] %vm1858, %v1817
      %1887 = vst.msk [vmem:[%s262 + $0xe0] sm:$0xff] %vm1858, %v1819
      %1888 = vst.msk [vmem:[%s262 + $0xe8] sm:$0xff] %vm1858, %v1821
      %1889 = vst.msk [vmem:[%s262 + $0xf0] sm:$0xff] %vm1858, %v1823
      %1890 = vst.msk [vmem:[%s262 + $0xf8] sm:$0xff] %vm1858, %v1825
      %v1891 = vtanh.pop %v1698
      %v1892 = vtanh.pop %v1699
      %v1893 = vtanh.pop %v1700
      %v1894 = vtanh.pop %v1701
      %v1895 = vtanh.pop %v1702
      %v1896 = vtanh.pop %v1703
      %v1897 = vtanh.pop %v1704
      %v1898 = vtanh.pop %v1705
      %v1899 = vtanh.pop %v1706
      %v1900 = vtanh.pop %v1707
      %v1901 = vtanh.pop %v1708
      %v1902 = vtanh.pop %v1709
      %v1903 = vtanh.pop %v1710
      %v1904 = vtanh.pop %v1711
      %v1905 = vtanh.pop %v1712
      %v1906 = vtanh.pop %v1713
      %v1907 = vtanh.pop %v1714
      %v1908 = vtanh.pop %v1715
      %v1909 = vtanh.pop %v1716
      %v1910 = vtanh.pop %v1717
      %v1911 = vtanh.pop %v1718
      %v1912 = vtanh.pop %v1719
      %v1913 = vtanh.pop %v1720
      %v1914 = vtanh.pop %v1721
      %v1915 = vtanh.pop %v1722
      %v1916 = vtanh.pop %v1723
      %v1917 = vtanh.pop %v1724
      %v1918 = vtanh.pop %v1725
      %v1919 = vtanh.pop %v1726
      %v1920 = vtanh.pop %v1727
      %v1921 = vtanh.pop %v1728
      %v1922 = vtanh.pop %v1729
      %1955 = vrot.lane.b32.xlu0 %v1891, 8
      %v1956 = vpop.permute.xlu0 %1955
      %1957 = vrot.lane.b32.xlu0 %v1892, 8
      %v1958 = vpop.permute.xlu0 %1957
      %1959 = vrot.lane.b32.xlu0 %v1893, 8
      %v1960 = vpop.permute.xlu0 %1959
      %1961 = vrot.lane.b32.xlu0 %v1894, 8
      %v1962 = vpop.permute.xlu0 %1961
      %1963 = vrot.lane.b32.xlu0 %v1895, 8
      %v1964 = vpop.permute.xlu0 %1963
      %1965 = vrot.lane.b32.xlu0 %v1896, 8
      %v1966 = vpop.permute.xlu0 %1965
      %1967 = vrot.lane.b32.xlu0 %v1897, 8
      %v1968 = vpop.permute.xlu0 %1967
      %1969 = vrot.lane.b32.xlu0 %v1898, 8
      %v1970 = vpop.permute.xlu0 %1969
      %1971 = vrot.lane.b32.xlu0 %v1899, 8
      %v1972 = vpop.permute.xlu0 %1971
      %1973 = vrot.lane.b32.xlu0 %v1900, 8
      %v1974 = vpop.permute.xlu0 %1973
      %1975 = vrot.lane.b32.xlu0 %v1901, 8
      %v1976 = vpop.permute.xlu0 %1975
      %1977 = vrot.lane.b32.xlu0 %v1902, 8
      %v1978 = vpop.permute.xlu0 %1977
      %1979 = vrot.lane.b32.xlu0 %v1903, 8
      %v1980 = vpop.permute.xlu0 %1979
      %1981 = vrot.lane.b32.xlu0 %v1904, 8
      %v1982 = vpop.permute.xlu0 %1981
      %1983 = vrot.lane.b32.xlu0 %v1905, 8
      %v1984 = vpop.permute.xlu0 %1983
      %1985 = vrot.lane.b32.xlu0 %v1906, 8
      %v1986 = vpop.permute.xlu0 %1985
      %1987 = vrot.lane.b32.xlu0 %v1907, 8
      %v1988 = vpop.permute.xlu0 %1987
      %1989 = vrot.lane.b32.xlu0 %v1908, 8
      %v1990 = vpop.permute.xlu0 %1989
      %1991 = vrot.lane.b32.xlu0 %v1909, 8
      %v1992 = vpop.permute.xlu0 %1991
      %1993 = vrot.lane.b32.xlu0 %v1910, 8
      %v1994 = vpop.permute.xlu0 %1993
      %1995 = vrot.lane.b32.xlu0 %v1911, 8
      %v1996 = vpop.permute.xlu0 %1995
      %1997 = vrot.lane.b32.xlu0 %v1912, 8
      %v1998 = vpop.permute.xlu0 %1997
      %1999 = vrot.lane.b32.xlu0 %v1913, 8
      %v2000 = vpop.permute.xlu0 %1999
      %2001 = vrot.lane.b32.xlu0 %v1914, 8
      %v2002 = vpop.permute.xlu0 %2001
      %2003 = vrot.lane.b32.xlu0 %v1915, 8
      %v2004 = vpop.permute.xlu0 %2003
      %2005 = vrot.lane.b32.xlu0 %v1916, 8
      %v2006 = vpop.permute.xlu0 %2005
      %2007 = vrot.lane.b32.xlu0 %v1917, 8
      %v2008 = vpop.permute.xlu0 %2007
      %2009 = vrot.lane.b32.xlu0 %v1918, 8
      %v2010 = vpop.permute.xlu0 %2009
      %2011 = vrot.lane.b32.xlu0 %v1919, 8
      %v2012 = vpop.permute.xlu0 %2011
      %2013 = vrot.lane.b32.xlu0 %v1920, 8
      %v2014 = vpop.permute.xlu0 %2013
      %2015 = vrot.lane.b32.xlu0 %v1921, 8
      %v2016 = vpop.permute.xlu0 %2015
      %2017 = vrot.lane.b32.xlu0 %v1922, 8
      %v2018 = vpop.permute.xlu0 %2017
      %v2051 = vmul.f32 %v720, %v1956
      %v2052 = vmul.f32 %v735, %v1958
      %v2053 = vmul.f32 %v750, %v1960
      %v2054 = vmul.f32 %v765, %v1962
      %v2055 = vmul.f32 %v780, %v1964
      %v2056 = vmul.f32 %v795, %v1966
      %v2057 = vmul.f32 %v810, %v1968
      %v2058 = vmul.f32 %v825, %v1970
      %v2059 = vmul.f32 %v840, %v1972
      %v2060 = vmul.f32 %v855, %v1974
      %v2061 = vmul.f32 %v870, %v1976
      %v2062 = vmul.f32 %v885, %v1978
      %v2063 = vmul.f32 %v900, %v1980
      %v2064 = vmul.f32 %v915, %v1982
      %v2065 = vmul.f32 %v930, %v1984
      %v2066 = vmul.f32 %v945, %v1986
      %v2067 = vmul.f32 %v960, %v1988
      %v2068 = vmul.f32 %v975, %v1990
      %v2069 = vmul.f32 %v990, %v1992
      %v2070 = vmul.f32 %v1005, %v1994
      %v2071 = vmul.f32 %v1020, %v1996
      %v2072 = vmul.f32 %v1035, %v1998
      %v2073 = vmul.f32 %v1050, %v2000
      %v2074 = vmul.f32 %v1065, %v2002
      %v2075 = vmul.f32 %v1080, %v2004
      %v2076 = vmul.f32 %v1095, %v2006
      %v2077 = vmul.f32 %v1110, %v2008
      %v2078 = vmul.f32 %v1125, %v2010
      %v2079 = vmul.f32 %v1140, %v2012
      %v2080 = vmul.f32 %v1155, %v2014
      %v2081 = vmul.f32 %v1170, %v2016
      %v2082 = vmul.f32 %v1185, %v2018
      %2115 = vrot.lane.b32.xlu0 %v2051, 112
      %v2116 = vpop.permute.xlu0 %2115
      %2117 = vrot.lane.b32.xlu0 %v2052, 112
      %v2118 = vpop.permute.xlu0 %2117
      %2119 = vrot.lane.b32.xlu0 %v2053, 112
      %v2120 = vpop.permute.xlu0 %2119
      %2121 = vrot.lane.b32.xlu0 %v2054, 112
      %v2122 = vpop.permute.xlu0 %2121
      %2123 = vrot.lane.b32.xlu0 %v2055, 112
      %v2124 = vpop.permute.xlu0 %2123
      %2125 = vrot.lane.b32.xlu0 %v2056, 112
      %v2126 = vpop.permute.xlu0 %2125
      %2127 = vrot.lane.b32.xlu0 %v2057, 112
      %v2128 = vpop.permute.xlu0 %2127
      %2129 = vrot.lane.b32.xlu0 %v2058, 112
      %v2130 = vpop.permute.xlu0 %2129
      %2131 = vrot.lane.b32.xlu0 %v2059, 112
      %v2132 = vpop.permute.xlu0 %2131
      %2133 = vrot.lane.b32.xlu0 %v2060, 112
      %v2134 = vpop.permute.xlu0 %2133
      %2135 = vrot.lane.b32.xlu0 %v2061, 112
      %v2136 = vpop.permute.xlu0 %2135
      %2137 = vrot.lane.b32.xlu0 %v2062, 112
      %v2138 = vpop.permute.xlu0 %2137
      %2139 = vrot.lane.b32.xlu0 %v2063, 112
      %v2140 = vpop.permute.xlu0 %2139
      %2141 = vrot.lane.b32.xlu0 %v2064, 112
      %v2142 = vpop.permute.xlu0 %2141
      %2143 = vrot.lane.b32.xlu0 %v2065, 112
      %v2144 = vpop.permute.xlu0 %2143
      %2145 = vrot.lane.b32.xlu0 %v2066, 112
      %v2146 = vpop.permute.xlu0 %2145
      %2147 = vrot.lane.b32.xlu0 %v2067, 112
      %v2148 = vpop.permute.xlu0 %2147
      %2149 = vrot.lane.b32.xlu0 %v2068, 112
      %v2150 = vpop.permute.xlu0 %2149
      %2151 = vrot.lane.b32.xlu0 %v2069, 112
      %v2152 = vpop.permute.xlu0 %2151
      %2153 = vrot.lane.b32.xlu0 %v2070, 112
      %v2154 = vpop.permute.xlu0 %2153
      %2155 = vrot.lane.b32.xlu0 %v2071, 112
      %v2156 = vpop.permute.xlu0 %2155
      %2157 = vrot.lane.b32.xlu0 %v2072, 112
      %v2158 = vpop.permute.xlu0 %2157
      %2159 = vrot.lane.b32.xlu0 %v2073, 112
      %v2160 = vpop.permute.xlu0 %2159
      %2161 = vrot.lane.b32.xlu0 %v2074, 112
      %v2162 = vpop.permute.xlu0 %2161
      %2163 = vrot.lane.b32.xlu0 %v2075, 112
      %v2164 = vpop.permute.xlu0 %2163
      %2165 = vrot.lane.b32.xlu0 %v2076, 112
      %v2166 = vpop.permute.xlu0 %2165
      %2167 = vrot.lane.b32.xlu0 %v2077, 112
      %v2168 = vpop.permute.xlu0 %2167
      %2169 = vrot.lane.b32.xlu0 %v2078, 112
      %v2170 = vpop.permute.xlu0 %2169
      %2171 = vrot.lane.b32.xlu0 %v2079, 112
      %v2172 = vpop.permute.xlu0 %2171
      %2173 = vrot.lane.b32.xlu0 %v2080, 112
      %v2174 = vpop.permute.xlu0 %2173
      %2175 = vrot.lane.b32.xlu0 %v2081, 112
      %v2176 = vpop.permute.xlu0 %2175
      %2177 = vrot.lane.b32.xlu0 %v2082, 112
      %v2178 = vpop.permute.xlu0 %2177
      %2211 = vst.msk [vmem:[%s256] sm:$0xff] %vm1858, %v2116
      %2212 = vst.msk [vmem:[%s256 + $0x8] sm:$0xff] %vm1858, %v2118
      %2213 = vst.msk [vmem:[%s256 + $0x10] sm:$0xff] %vm1858, %v2120
      %2214 = vst.msk [vmem:[%s256 + $0x18] sm:$0xff] %vm1858, %v2122
      %2215 = vst.msk [vmem:[%s256 + $0x20] sm:$0xff] %vm1858, %v2124
      %2216 = vst.msk [vmem:[%s256 + $0x28] sm:$0xff] %vm1858, %v2126
      %2217 = vst.msk [vmem:[%s256 + $0x30] sm:$0xff] %vm1858, %v2128
      %2218 = vst.msk [vmem:[%s256 + $0x38] sm:$0xff] %vm1858, %v2130
      %2219 = vst.msk [vmem:[%s256 + $0x40] sm:$0xff] %vm1858, %v2132
      %2220 = vst.msk [vmem:[%s256 + $0x48] sm:$0xff] %vm1858, %v2134
      %2221 = vst.msk [vmem:[%s256 + $0x50] sm:$0xff] %vm1858, %v2136
      %2222 = vst.msk [vmem:[%s256 + $0x58] sm:$0xff] %vm1858, %v2138
      %2223 = vst.msk [vmem:[%s256 + $0x60] sm:$0xff] %vm1858, %v2140
      %2224 = vst.msk [vmem:[%s256 + $0x68] sm:$0xff] %vm1858, %v2142
      %2225 = vst.msk [vmem:[%s256 + $0x70] sm:$0xff] %vm1858, %v2144
      %2226 = vst.msk [vmem:[%s256 + $0x78] sm:$0xff] %vm1858, %v2146
      %2227 = vst.msk [vmem:[%s256 + $0x80] sm:$0xff] %vm1858, %v2148
      %2228 = vst.msk [vmem:[%s256 + $0x88] sm:$0xff] %vm1858, %v2150
      %2229 = vst.msk [vmem:[%s256 + $0x90] sm:$0xff] %vm1858, %v2152
      %2230 = vst.msk [vmem:[%s256 + $0x98] sm:$0xff] %vm1858, %v2154
      %2231 = vst.msk [vmem:[%s256 + $0xa0] sm:$0xff] %vm1858, %v2156
      %2232 = vst.msk [vmem:[%s256 + $0xa8] sm:$0xff] %vm1858, %v2158
      %2233 = vst.msk [vmem:[%s256 + $0xb0] sm:$0xff] %vm1858, %v2160
      %2234 = vst.msk [vmem:[%s256 + $0xb8] sm:$0xff] %vm1858, %v2162
      %2235 = vst.msk [vmem:[%s256 + $0xc0] sm:$0xff] %vm1858, %v2164
      %2236 = vst.msk [vmem:[%s256 + $0xc8] sm:$0xff] %vm1858, %v2166
      %2237 = vst.msk [vmem:[%s256 + $0xd0] sm:$0xff] %vm1858, %v2168
      %2238 = vst.msk [vmem:[%s256 + $0xd8] sm:$0xff] %vm1858, %v2170
      %2239 = vst.msk [vmem:[%s256 + $0xe0] sm:$0xff] %vm1858, %v2172
      %2240 = vst.msk [vmem:[%s256 + $0xe8] sm:$0xff] %vm1858, %v2174
      %2241 = vst.msk [vmem:[%s256 + $0xf0] sm:$0xff] %vm1858, %v2176
      %2242 = vst.msk [vmem:[%s256 + $0xf8] sm:$0xff] %vm1858, %v2178
      %s2243 = smul.u32 32, %s17
      %p2244 = scmp.lt.s32.totalorder %s2243, 63
      %s2245 = scalar_select %p2244, %s2243, 63
      %s2246 = smul.addr %s2245, 8
      %s2247 = scalar_lea.vmem %s4, %s2246
      %s2248 = smul.u32 32, %s17
      %p2249 = scmp.lt.s32.totalorder %s2248, 63
      %s2250 = scalar_select %p2249, %s2248, 63
      %s2251 = smul.addr %s2250, 8
      %s2252 = scalar_lea.vmem %s5, %s2251
      // Predicated region
      $region37: #{tpu_custom_call.1} parent=35 // pred_check
        %p2253 = pneg %p129
      $region38: #{tpu_custom_call.1} parent=35 // pred_check_branch
        %2255 = sbr.rel (%p2253) target = $region40
      $region39: #{tpu_custom_call.1} parent=35 // pred_region
        %s2256 = smul.u32 32, %s17
      $region40: #{tpu_custom_call.1} parent=35 // pred_fallthru
        _
      // Predicated region
      $region41: #{tpu_custom_call.1} parent=35 // pred_check
        %p2257 = pneg %p155
      $region42: #{tpu_custom_call.1} parent=35 // pred_check_branch
        %2259 = sbr.rel (%p2257) target = $region44
      $region43: #{tpu_custom_call.1} parent=35 // pred_region
        %s2260 = smul.u32 32, %s17
      $region44: #{tpu_custom_call.1} parent=35 // pred_fallthru
        _
    $region36: #{tpu_custom_call.1} parent=5 // pred_fallthru
      _
    %p2261 = scmp.le.s32.totalorder 2, %s12
    // Predicated region
    $region45: #{tpu_custom_call.1} parent=5 // pred_check
      %p2262 = pneg %p2261
    $region46: #{tpu_custom_call.1} parent=5 // pred_check_branch
      %2264 = sbr.rel (%p2262) target = $region48
    $region47: #{tpu_custom_call.1} parent=5 // pred_region
      %s2265 = ssub.s32 %s12, 2
      // Predicated region
      $region49: #{tpu_custom_call.1} parent=47 // pred_check
        %p2266 = pneg %p135
      $region50: #{tpu_custom_call.1} parent=47 // pred_check_branch
        %2268 = sbr.rel (%p2266) target = $region52
      $region51: #{tpu_custom_call.1} parent=47 // pred_region
        %s2269 = smul.u32 32, %s18
        %p2270 = scmp.lt.s32.totalorder %s2269, 63
        %s2271 = scalar_select %p2270, %s2269, 63
        %s2272 = smul.addr %s2271, 8
        %s2273 = scalar_lea.vmem %s4, %s2272
      $region52: #{tpu_custom_call.1} parent=47 // pred_fallthru
        _
      // Predicated region
      $region53: #{tpu_custom_call.1} parent=47 // pred_check
        %p2274 = pneg %p161
      $region54: #{tpu_custom_call.1} parent=47 // pred_check_branch
        %2276 = sbr.rel (%p2274) target = $region56
      $region55: #{tpu_custom_call.1} parent=47 // pred_region
        %s2277 = smul.u32 32, %s18
        %p2278 = scmp.lt.s32.totalorder %s2277, 63
        %s2279 = scalar_select %p2278, %s2277, 63
        %s2280 = smul.addr %s2279, 8
        %s2281 = scalar_lea.vmem %s5, %s2280
      $region56: #{tpu_custom_call.1} parent=47 // pred_fallthru
        _
    $region48: #{tpu_custom_call.1} parent=5 // pred_fallthru
      _
  $region6: #{tpu_custom_call.1} parent=0 // loop_footer
    %s16 = sadd.s32 1, %s12
  $region7: #{tpu_custom_call.1} parent=0 // loop_footer_branch
    %11 = sbr.rel target = $region3
  $region8: #{tpu_custom_call.1} parent=0 // loop_exit
    _

</llo_original>
